<compile_context>
chip_gen: v7x
topology: tpu7x:2x2x1
jax: 0.10.0
libtpu: 0.0.40
codegen_flags: <defaults>
</compile_context>

<pallas_src>
import jax
import jax.numpy as jnp
import numpy as np
from jax.experimental import pallas as pl
from jax.experimental.pallas import tpu as pltpu


def _mm(a, b):
    # Mosaic lowers f32 x f32 matmuls at full f32 accuracy; keep f32 inputs so the
    # 1e-4 comparison against the pure-JAX reference stays robust.
    return jnp.dot(a, b, preferred_element_type=jnp.float32)


def seq_net_kernel(x_ref, w11_ref, b11_ref, w12_ref, b12_ref,
                   w21_ref, b21_ref, w22_ref, b22_ref,
                   pc_ref, pl1_ref, pl2_ref, out_ref):
    def conv_block(h_in, w1, b1, wcat, b2):
        # 1x1 conv + ReLU.  rows = sequence position, lanes = (batch, channel).
        h1 = jnp.maximum(_mm(h_in, w1) + b1, 0.0)
        # k=3 pad=1 conv: neighbours via XLU sublane roll, zero the boundary rows,
        # then fuse the 3 taps into a single matmul on the lane axis.
        n_rows = h1.shape[0]
        rows = jax.lax.broadcasted_iota(jnp.int32, h1.shape, 0)
        hm = jnp.where(rows == 0, 0.0, pltpu.roll(h1, 1, axis=0))               # h1[l-1]
        hp = jnp.where(rows == n_rows - 1, 0.0,
                       pltpu.roll(h1, n_rows - 1, axis=0))                      # h1[l+1]
        hcat = jnp.concatenate([hm, h1, hp], axis=-1)                           # (rows, 3*B*C)
        h2 = jnp.maximum(_mm(hcat, wcat) + b2, 0.0)
        return h2 + h_in                                                        # residual

    x = x_ref[...]                                                              # (L, B*C)
    r1 = conv_block(x, w11_ref[...], b11_ref[...], w12_ref[...], b12_ref[...])
    # AvgPool2d(2): channel pairs via pc (B*C, B*H), length pairs via pl1 (L/2, L)
    p1 = _mm(pl1_ref[...], _mm(r1, pc_ref[...]))                                # (L/2, B*H)
    r2 = conv_block(p1, w21_ref[...], b21_ref[...], w22_ref[...], b22_ref[...])
    # AvgPool1d(2) + final ReLU
    out_ref[...] = jnp.maximum(_mm(pl2_ref[...], r2), 0.0)                      # (L/4, B*H)


def choose_b_lane(n, c):
    """Lane-packing factor: target >=128 output lanes, don't over-pad tiny batches."""
    h = max(1, c // 2)
    target = max(1, 128 // h)
    cap = 1 << max(0, n - 1).bit_length()       # next power of two >= n
    return max(1, min(target, cap))


def pack_params(params, b_lane):
    """One-time conversion of PyTorch-shaped weights into kernel-format operands."""
    w11, b11, w12, b12, w21, b21, w22, b22 = params
    f32 = jnp.float32
    C = w11.shape[0]
    H = w21.shape[0]
    assert H == C // 2, "hidden_size1 must equal input_size // 2"
    eye_b = jnp.eye(b_lane, dtype=f32)

    def kron_w(w_oi):                            # (O, I) -> block-diagonal (B*I, B*O)
        return jnp.kron(eye_b, w_oi.T.astype(f32))

    def tile_b(b):
        return jnp.tile(b.astype(f32), b_lane).reshape(1, -1)

    w11k = kron_w(w11[:, :, 0])                                                 # (BC, BC)
    w12k = jnp.concatenate([kron_w(w12[:, :, t]) for t in range(3)], axis=0)    # (3BC, BC)
    w21k = kron_w(w21[:, :, 0])                                                 # (BH, BH)
    w22k = jnp.concatenate([kron_w(w22[:, :, t]) for t in range(3)], axis=0)    # (3BH, BH)
    pc = 0.5 * jnp.repeat(jnp.eye(H, dtype=f32), 2, axis=0)                     # (C, H)
    pck = jnp.kron(eye_b, pc)                                                   # (BC, BH)
    return (w11k, tile_b(b11), w12k, tile_b(b12),
            w21k, tile_b(b21), w22k, tile_b(b22), pck)


@jax.jit
def seq_net_forward(x_ncl, kparams):
    """x_ncl: (N, C, L) float32, PyTorch Conv1d NCL layout. kparams from pack_params."""
    w11k, b11k, w12k, b12k, w21k, b21k, w22k, b22k, pck = kparams
    N, C, L = x_ncl.shape
    assert C % 2 == 0 and L % 4 == 0
    BC = w11k.shape[0]
    b_lane = BC // C
    BH = pck.shape[1]
    H = BH // b_lane
    L2, L4 = L // 2, L // 4
    f32 = jnp.float32

    # batch padding + lane packing: (N, C, L) -> (G, L, b_lane*C), lane = b*C + c.
    # (zero-padded batches are independent blocks of the block-diagonal weights)
    G = pl.cdiv(N, b_lane)
    n_pad = G * b_lane
    x = x_ncl.astype(f32)
    if n_pad != N:
        x = jnp.pad(x, ((0, n_pad - N), (0, 0), (0, 0)))
    x_packed = x.reshape(G, b_lane, C, L).transpose(0, 3, 1, 2).reshape(G, L, BC)

    # per-row-tile length-pooling matrices (tiny; constant-folded under jit)
    plen1 = 0.5 * jnp.repeat(jnp.eye(L2, dtype=f32), 2, axis=1)                 # (L2, L)
    plen2 = 0.5 * jnp.repeat(jnp.eye(L4, dtype=f32), 2, axis=1)                 # (L4, L2)

    def resident(shape):
        return pl.BlockSpec(shape, lambda g, _s=len(shape): (0,) * _s)

    out_packed = pl.pallas_call(
        seq_net_kernel,
        out_shape=jax.ShapeDtypeStruct((G, L4, BH), f32),
        grid=(G,),
        in_specs=[
            pl.BlockSpec((None, L, BC), lambda g: (g, 0, 0)),   # lane-packed activations
            resident((BC, BC)), resident((1, BC)),              # conv1x1 block 1
            resident((3 * BC, BC)), resident((1, BC)),          # fused k=3 block 1
            resident((BH, BH)), resident((1, BH)),              # conv1x1 block 2
            resident((3 * BH, BH)), resident((1, BH)),          # fused k=3 block 2
            resident((BC, BH)),                                 # channel pooling
            resident((L2, L)), resident((L4, L2)),              # length pooling
        ],
        out_specs=pl.BlockSpec((None, L4, BH), lambda g: (g, 0, 0)),
        compiler_params=pltpu.CompilerParams(
            dimension_semantics=("parallel",),
            vmem_limit_bytes=32 * 1024 * 1024,
        ),
    )(x_packed, w11k, b11k, w12k, b12k, w21k, b21k, w22k, b22k, pck, plen1, plen2)

    # unpack lanes -> (N, H, L4) -> PyTorch out.view(N, -1) ordering
    out = out_packed.reshape(G, L4, b_lane, H).transpose(0, 2, 3, 1)
    out = out.reshape(n_pad, H, L4)[:N]
    return out.reshape(N, H * L4)


def reference_forward(x, params):
    """Pure-JAX reference following the PyTorch module semantics exactly."""
    w11, b11, w12, b12, w21, b21, w22, b22 = params

    def conv1d_k1(x, w, b):
        return jnp.einsum('oi,nil->nol', w[:, :, 0], x) + b[None, :, None]

    def conv1d_k3(x, w, b):
        L = x.shape[-1]
        xp = jnp.pad(x, ((0, 0), (0, 0), (1, 1)))
        return (jnp.einsum('oi,nil->nol', w[:, :, 0], xp[:, :, 0:L]) +
                jnp.einsum('oi,nil->nol', w[:, :, 1], xp[:, :, 1:L + 1]) +
                jnp.einsum('oi,nil->nol', w[:, :, 2], xp[:, :, 2:L + 2]) +
                b[None, :, None])

    def block(x, w1, b1, w2, b2):
        out = jax.nn.relu(conv1d_k1(x, w1, b1))
        out = jax.nn.relu(conv1d_k3(out, w2, b2))
        return out + x

    c = block(x, w11, b11, w12, b12)
    N, C, L = c.shape
    p = c.reshape(N, C // 2, 2, L // 2, 2).mean(axis=(2, 4))        # AvgPool2d(2) on 3-D input
    c = block(p, w21, b21, w22, b22)
    N, H, L2 = c.shape
    p = c.reshape(N, H, L2 // 2, 2).mean(axis=-1)                   # AvgPool1d(2)
    out = jax.nn.relu(p)
    return out.reshape(N, -1)


if __name__ == "__main__":
    key = jax.random.PRNGKey(0)
    N, C, L = 128, 8, 16          # batch, input_size (channels), sequence length
    H = C // 2                    # hidden_size1 must equal input_size // 2
    ks = jax.random.split(key, 9)
    scale = 0.2
    x = jax.random.normal(ks[0], (N, C, L), jnp.float32)
    w11 = scale * jax.random.normal(ks[1], (C, C, 1), jnp.float32)
    b11 = scale * jax.random.normal(ks[2], (C,), jnp.float32)
    w12 = scale * jax.random.normal(ks[3], (C, C, 3), jnp.float32)
    b12 = scale * jax.random.normal(ks[4], (C,), jnp.float32)
    w21 = scale * jax.random.normal(ks[5], (H, H, 1), jnp.float32)
    b21 = scale * jax.random.normal(ks[6], (H,), jnp.float32)
    w22 = scale * jax.random.normal(ks[7], (H, H, 3), jnp.float32)
    b22 = scale * jax.random.normal(ks[8], (H,), jnp.float32)
    params = (w11, b11, w12, b12, w21, b21, w22, b22)

    # hoisted, one-time weight preprocessing (lane-packed / kron'd operands)
    b_lane = choose_b_lane(N, C)              # 32 -> 256 input lanes / 128 output lanes
    kparams = pack_params(params, b_lane)

    out = jax.block_until_ready(seq_net_forward(x, kparams))

    ref = reference_forward(x, params)
    assert out.shape == (N, H * (L // 4)), out.shape
    if not np.allclose(np.asarray(out), np.asarray(ref), rtol=1e-4, atol=1e-4):
        raise AssertionError("Pallas kernel does not match JAX reference")
    print("KERNEL_OK")
</pallas_src>

<mosaic_0001>
module attributes {stable_mosaic.version = 11 : i64} {
  func.func @seq_net_kernel(%arg0: i32, %arg1: memref<1x16x256xf32, #tpu.memory_space<vmem>>, %arg2: memref<256x256xf32, #tpu.memory_space<vmem>>, %arg3: memref<1x256xf32, #tpu.memory_space<vmem>>, %arg4: memref<768x256xf32, #tpu.memory_space<vmem>>, %arg5: memref<1x256xf32, #tpu.memory_space<vmem>>, %arg6: memref<128x128xf32, #tpu.memory_space<vmem>>, %arg7: memref<1x128xf32, #tpu.memory_space<vmem>>, %arg8: memref<384x128xf32, #tpu.memory_space<vmem>>, %arg9: memref<1x128xf32, #tpu.memory_space<vmem>>, %arg10: memref<256x128xf32, #tpu.memory_space<vmem>>, %arg11: memref<8x16xf32, #tpu.memory_space<vmem>>, %arg12: memref<4x8xf32, #tpu.memory_space<vmem>>, %arg13: memref<1x4x128xf32, #tpu.memory_space<vmem>>) attributes {dimension_semantics = [#tpu.dimension_semantics<parallel>], iteration_bounds = array<i64: 4>, scalar_prefetch = 0 : i64, scratch_operands = 0 : i64, tpu.core_type = #tpu.core_type<tc>, window_params = [{transform_indices = @transform_0, window_bounds = array<i64: 1, 16, 256>}, {pipeline_mode = #tpu.pipeline_mode<synchronous>, transform_indices = @transform_1, window_bounds = array<i64: 256, 256>}, {pipeline_mode = #tpu.pipeline_mode<synchronous>, transform_indices = @transform_2, window_bounds = array<i64: 1, 256>}, {pipeline_mode = #tpu.pipeline_mode<synchronous>, transform_indices = @transform_3, window_bounds = array<i64: 768, 256>}, {pipeline_mode = #tpu.pipeline_mode<synchronous>, transform_indices = @transform_4, window_bounds = array<i64: 1, 256>}, {pipeline_mode = #tpu.pipeline_mode<synchronous>, transform_indices = @transform_5, window_bounds = array<i64: 128, 128>}, {pipeline_mode = #tpu.pipeline_mode<synchronous>, transform_indices = @transform_6, window_bounds = array<i64: 1, 128>}, {pipeline_mode = #tpu.pipeline_mode<synchronous>, transform_indices = @transform_7, window_bounds = array<i64: 384, 128>}, {pipeline_mode = #tpu.pipeline_mode<synchronous>, transform_indices = @transform_8, window_bounds = array<i64: 1, 128>}, {pipeline_mode = #tpu.pipeline_mode<synchronous>, transform_indices = @transform_9, window_bounds = array<i64: 256, 128>}, {pipeline_mode = #tpu.pipeline_mode<synchronous>, transform_indices = @transform_10, window_bounds = array<i64: 8, 16>}, {pipeline_mode = #tpu.pipeline_mode<synchronous>, transform_indices = @transform_11, window_bounds = array<i64: 4, 8>}, {transform_indices = @transform_12, window_bounds = array<i64: 1, 4, 128>}]} {
    %c0 = arith.constant 0 : index
    %c0_0 = arith.constant 0 : index
    %c0_1 = arith.constant 0 : index
    %0 = vector.load %arg1[%c0, %c0_0, %c0_1] : memref<1x16x256xf32, #tpu.memory_space<vmem>>, vector<1x16x256xf32>
    %1 = vector.shape_cast %0 : vector<1x16x256xf32> to vector<16x256xf32>
    %c0_2 = arith.constant 0 : index
    %c0_3 = arith.constant 0 : index
    %2 = vector.load %arg2[%c0_2, %c0_3] : memref<256x256xf32, #tpu.memory_space<vmem>>, vector<256x256xf32>
    %c0_4 = arith.constant 0 : index
    %c0_5 = arith.constant 0 : index
    %3 = vector.load %arg3[%c0_4, %c0_5] : memref<1x256xf32, #tpu.memory_space<vmem>>, vector<1x256xf32>
    %c0_6 = arith.constant 0 : index
    %c0_7 = arith.constant 0 : index
    %4 = vector.load %arg4[%c0_6, %c0_7] : memref<768x256xf32, #tpu.memory_space<vmem>>, vector<768x256xf32>
    %c0_8 = arith.constant 0 : index
    %c0_9 = arith.constant 0 : index
    %5 = vector.load %arg5[%c0_8, %c0_9] : memref<1x256xf32, #tpu.memory_space<vmem>>, vector<1x256xf32>
    %cst = arith.constant dense<0.000000e+00> : vector<16x256xf32>
    %6 = tpu.matmul %1, %2, %cst {dimension_numbers = #tpu.dot_dimension_numbers<[1], [0], [0], [1], [0, 0, 1, 1], [], []>} : vector<16x256xf32>, vector<256x256xf32>, vector<16x256xf32> -> vector<16x256xf32>
    %7 = vector.broadcast %3 : vector<1x256xf32> to vector<16x256xf32>
    %8 = arith.addf %6, %7 : vector<16x256xf32>
    %cst_10 = arith.constant 0.000000e+00 : f32
    %9 = vector.broadcast %cst_10 : f32 to vector<16x256xf32>
    %10 = arith.maximumf %8, %9 : vector<16x256xf32>
    %11 = tpu.iota {dimensions = array<i32: 0>} : vector<16x256xi32>
    %c0_i32 = arith.constant 0 : i32
    %12 = vector.broadcast %c0_i32 : i32 to vector<16x256xi32>
    %13 = arith.cmpi eq, %11, %12 : vector<16x256xi32>
    %c1_i32 = arith.constant 1 : i32
    %14 = tpu.dynamic_rotate %10 by %c1_i32 dim 0 : vector<16x256xf32>, i32 -> vector<16x256xf32>
    %cst_11 = arith.constant 0.000000e+00 : f32
    %15 = vector.broadcast %cst_11 : f32 to vector<16x256xf32>
    %16 = arith.select %13, %15, %14 : vector<16x256xi1>, vector<16x256xf32>
    %c15_i32 = arith.constant 15 : i32
    %17 = vector.broadcast %c15_i32 : i32 to vector<16x256xi32>
    %18 = arith.cmpi eq, %11, %17 : vector<16x256xi32>
    %c15_i32_12 = arith.constant 15 : i32
    %19 = tpu.dynamic_rotate %10 by %c15_i32_12 dim 0 : vector<16x256xf32>, i32 -> vector<16x256xf32>
    %cst_13 = arith.constant 0.000000e+00 : f32
    %20 = vector.broadcast %cst_13 : f32 to vector<16x256xf32>
    %21 = arith.select %18, %20, %19 : vector<16x256xi1>, vector<16x256xf32>
    %22 = tpu.concatenate %16, %10, %21 in 1 : vector<16x256xf32>, vector<16x256xf32>, vector<16x256xf32> -> vector<16x768xf32>
    %cst_14 = arith.constant dense<0.000000e+00> : vector<16x256xf32>
    %23 = tpu.matmul %22, %4, %cst_14 {dimension_numbers = #tpu.dot_dimension_numbers<[1], [0], [0], [1], [0, 0, 1, 1], [], []>} : vector<16x768xf32>, vector<768x256xf32>, vector<16x256xf32> -> vector<16x256xf32>
    %24 = vector.broadcast %5 : vector<1x256xf32> to vector<16x256xf32>
    %25 = arith.addf %23, %24 : vector<16x256xf32>
    %cst_15 = arith.constant 0.000000e+00 : f32
    %26 = vector.broadcast %cst_15 : f32 to vector<16x256xf32>
    %27 = arith.maximumf %25, %26 : vector<16x256xf32>
    %28 = arith.addf %27, %1 : vector<16x256xf32>
    %c0_16 = arith.constant 0 : index
    %c0_17 = arith.constant 0 : index
    %29 = vector.load %arg11[%c0_16, %c0_17] : memref<8x16xf32, #tpu.memory_space<vmem>>, vector<8x16xf32>
    %c0_18 = arith.constant 0 : index
    %c0_19 = arith.constant 0 : index
    %30 = vector.load %arg10[%c0_18, %c0_19] : memref<256x128xf32, #tpu.memory_space<vmem>>, vector<256x128xf32>
    %cst_20 = arith.constant dense<0.000000e+00> : vector<16x128xf32>
    %31 = tpu.matmul %28, %30, %cst_20 {dimension_numbers = #tpu.dot_dimension_numbers<[1], [0], [0], [1], [0, 0, 1, 1], [], []>} : vector<16x256xf32>, vector<256x128xf32>, vector<16x128xf32> -> vector<16x128xf32>
    %cst_21 = arith.constant dense<0.000000e+00> : vector<8x128xf32>
    %32 = tpu.matmul %29, %31, %cst_21 {dimension_numbers = #tpu.dot_dimension_numbers<[1], [0], [0], [1], [0, 0, 1, 1], [], []>} : vector<8x16xf32>, vector<16x128xf32>, vector<8x128xf32> -> vector<8x128xf32>
    %c0_22 = arith.constant 0 : index
    %c0_23 = arith.constant 0 : index
    %33 = vector.load %arg6[%c0_22, %c0_23] : memref<128x128xf32, #tpu.memory_space<vmem>>, vector<128x128xf32>
    %c0_24 = arith.constant 0 : index
    %c0_25 = arith.constant 0 : index
    %34 = vector.load %arg7[%c0_24, %c0_25] : memref<1x128xf32, #tpu.memory_space<vmem>>, vector<1x128xf32>
    %c0_26 = arith.constant 0 : index
    %c0_27 = arith.constant 0 : index
    %35 = vector.load %arg8[%c0_26, %c0_27] : memref<384x128xf32, #tpu.memory_space<vmem>>, vector<384x128xf32>
    %c0_28 = arith.constant 0 : index
    %c0_29 = arith.constant 0 : index
    %36 = vector.load %arg9[%c0_28, %c0_29] : memref<1x128xf32, #tpu.memory_space<vmem>>, vector<1x128xf32>
    %cst_30 = arith.constant dense<0.000000e+00> : vector<8x128xf32>
    %37 = tpu.matmul %32, %33, %cst_30 {dimension_numbers = #tpu.dot_dimension_numbers<[1], [0], [0], [1], [0, 0, 1, 1], [], []>} : vector<8x128xf32>, vector<128x128xf32>, vector<8x128xf32> -> vector<8x128xf32>
    %38 = vector.broadcast %34 : vector<1x128xf32> to vector<8x128xf32>
    %39 = arith.addf %37, %38 : vector<8x128xf32>
    %cst_31 = arith.constant 0.000000e+00 : f32
    %40 = vector.broadcast %cst_31 : f32 to vector<8x128xf32>
    %41 = arith.maximumf %39, %40 : vector<8x128xf32>
    %42 = tpu.iota {dimensions = array<i32: 0>} : vector<8x128xi32>
    %c0_i32_32 = arith.constant 0 : i32
    %43 = vector.broadcast %c0_i32_32 : i32 to vector<8x128xi32>
    %44 = arith.cmpi eq, %42, %43 : vector<8x128xi32>
    %c1_i32_33 = arith.constant 1 : i32
    %45 = tpu.dynamic_rotate %41 by %c1_i32_33 dim 0 : vector<8x128xf32>, i32 -> vector<8x128xf32>
    %cst_34 = arith.constant 0.000000e+00 : f32
    %46 = vector.broadcast %cst_34 : f32 to vector<8x128xf32>
    %47 = arith.select %44, %46, %45 : vector<8x128xi1>, vector<8x128xf32>
    %c7_i32 = arith.constant 7 : i32
    %48 = vector.broadcast %c7_i32 : i32 to vector<8x128xi32>
    %49 = arith.cmpi eq, %42, %48 : vector<8x128xi32>
    %c7_i32_35 = arith.constant 7 : i32
    %50 = tpu.dynamic_rotate %41 by %c7_i32_35 dim 0 : vector<8x128xf32>, i32 -> vector<8x128xf32>
    %cst_36 = arith.constant 0.000000e+00 : f32
    %51 = vector.broadcast %cst_36 : f32 to vector<8x128xf32>
    %52 = arith.select %49, %51, %50 : vector<8x128xi1>, vector<8x128xf32>
    %53 = tpu.concatenate %47, %41, %52 in 1 : vector<8x128xf32>, vector<8x128xf32>, vector<8x128xf32> -> vector<8x384xf32>
    %cst_37 = arith.constant dense<0.000000e+00> : vector<8x128xf32>
    %54 = tpu.matmul %53, %35, %cst_37 {dimension_numbers = #tpu.dot_dimension_numbers<[1], [0], [0], [1], [0, 0, 1, 1], [], []>} : vector<8x384xf32>, vector<384x128xf32>, vector<8x128xf32> -> vector<8x128xf32>
    %55 = vector.broadcast %36 : vector<1x128xf32> to vector<8x128xf32>
    %56 = arith.addf %54, %55 : vector<8x128xf32>
    %cst_38 = arith.constant 0.000000e+00 : f32
    %57 = vector.broadcast %cst_38 : f32 to vector<8x128xf32>
    %58 = arith.maximumf %56, %57 : vector<8x128xf32>
    %59 = arith.addf %58, %32 : vector<8x128xf32>
    %c0_39 = arith.constant 0 : index
    %c0_40 = arith.constant 0 : index
    %60 = vector.load %arg12[%c0_39, %c0_40] : memref<4x8xf32, #tpu.memory_space<vmem>>, vector<4x8xf32>
    %cst_41 = arith.constant dense<0.000000e+00> : vector<4x128xf32>
    %61 = tpu.matmul %60, %59, %cst_41 {dimension_numbers = #tpu.dot_dimension_numbers<[1], [0], [0], [1], [0, 0, 1, 1], [], []>} : vector<4x8xf32>, vector<8x128xf32>, vector<4x128xf32> -> vector<4x128xf32>
    %cst_42 = arith.constant 0.000000e+00 : f32
    %62 = vector.broadcast %cst_42 : f32 to vector<4x128xf32>
    %63 = arith.maximumf %61, %62 : vector<4x128xf32>
    %c0_43 = arith.constant 0 : index
    %c0_44 = arith.constant 0 : index
    %c0_45 = arith.constant 0 : index
    %64 = vector.load %arg13[%c0_43, %c0_44, %c0_45] : memref<1x4x128xf32, #tpu.memory_space<vmem>>, vector<1x4x128xf32>
    %65 = vector.shape_cast %64 : vector<1x4x128xf32> to vector<4x128xf32>
    %66 = vector.shape_cast %63 : vector<4x128xf32> to vector<1x4x128xf32>
    tpu.vector_store %arg13[%c0_43, %c0_44, %c0_45], %66 {strides = array<i32>} : memref<1x4x128xf32, #tpu.memory_space<vmem>>, vector<1x4x128xf32>,
    return
  }
  func.func @transform_0(%arg0: i32) -> (i32, i32, i32) {
    %c0_i32 = arith.constant 0 : i32
    %c0_i32_0 = arith.constant 0 : i32
    %c0_i32_1 = arith.constant 0 : i32
    return %arg0, %c0_i32, %c0_i32_0 : i32, i32, i32
  }
  func.func @transform_1(%arg0: i32) -> (i32, i32) {
    %c0_i32 = arith.constant 0 : i32
    %c0_i32_0 = arith.constant 0 : i32
    %c0_i32_1 = arith.constant 0 : i32
    return %c0_i32, %c0_i32_0 : i32, i32
  }
  func.func @transform_2(%arg0: i32) -> (i32, i32) {
    %c0_i32 = arith.constant 0 : i32
    %c0_i32_0 = arith.constant 0 : i32
    %c0_i32_1 = arith.constant 0 : i32
    return %c0_i32, %c0_i32_0 : i32, i32
  }
  func.func @transform_3(%arg0: i32) -> (i32, i32) {
    %c0_i32 = arith.constant 0 : i32
    %c0_i32_0 = arith.constant 0 : i32
    %c0_i32_1 = arith.constant 0 : i32
    return %c0_i32, %c0_i32_0 : i32, i32
  }
  func.func @transform_4(%arg0: i32) -> (i32, i32) {
    %c0_i32 = arith.constant 0 : i32
    %c0_i32_0 = arith.constant 0 : i32
    %c0_i32_1 = arith.constant 0 : i32
    return %c0_i32, %c0_i32_0 : i32, i32
  }
  func.func @transform_5(%arg0: i32) -> (i32, i32) {
    %c0_i32 = arith.constant 0 : i32
    %c0_i32_0 = arith.constant 0 : i32
    %c0_i32_1 = arith.constant 0 : i32
    return %c0_i32, %c0_i32_0 : i32, i32
  }
  func.func @transform_6(%arg0: i32) -> (i32, i32) {
    %c0_i32 = arith.constant 0 : i32
    %c0_i32_0 = arith.constant 0 : i32
    %c0_i32_1 = arith.constant 0 : i32
    return %c0_i32, %c0_i32_0 : i32, i32
  }
  func.func @transform_7(%arg0: i32) -> (i32, i32) {
    %c0_i32 = arith.constant 0 : i32
    %c0_i32_0 = arith.constant 0 : i32
    %c0_i32_1 = arith.constant 0 : i32
    return %c0_i32, %c0_i32_0 : i32, i32
  }
  func.func @transform_8(%arg0: i32) -> (i32, i32) {
    %c0_i32 = arith.constant 0 : i32
    %c0_i32_0 = arith.constant 0 : i32
    %c0_i32_1 = arith.constant 0 : i32
    return %c0_i32, %c0_i32_0 : i32, i32
  }
  func.func @transform_9(%arg0: i32) -> (i32, i32) {
    %c0_i32 = arith.constant 0 : i32
    %c0_i32_0 = arith.constant 0 : i32
    %c0_i32_1 = arith.constant 0 : i32
    return %c0_i32, %c0_i32_0 : i32, i32
  }
  func.func @transform_10(%arg0: i32) -> (i32, i32) {
    %c0_i32 = arith.constant 0 : i32
    %c0_i32_0 = arith.constant 0 : i32
    %c0_i32_1 = arith.constant 0 : i32
    return %c0_i32, %c0_i32_0 : i32, i32
  }
  func.func @transform_11(%arg0: i32) -> (i32, i32) {
    %c0_i32 = arith.constant 0 : i32
    %c0_i32_0 = arith.constant 0 : i32
    %c0_i32_1 = arith.constant 0 : i32
    return %c0_i32, %c0_i32_0 : i32, i32
  }
  func.func @transform_12(%arg0: i32) -> (i32, i32, i32) {
    %c0_i32 = arith.constant 0 : i32
    %c0_i32_0 = arith.constant 0 : i32
    %c0_i32_1 = arith.constant 0 : i32
    return %arg0, %c0_i32, %c0_i32_0 : i32, i32, i32
  }
}

</mosaic_0001>

<llo_original>
// kernel: seq_net_forward.1
$region0: #{seq_net_forward.1}
  #allocation0 [shape = 'u32[]', space=smem, size = 0x4, offset = 0x4, fixed_abs, tag = 'smem constant byte address 0x4 - core index']
  #allocation1 [shape = 'u32[144,128]{1,0:T(1,128)}', space=vmem, size = 0x12000, scoped, tag = 'internal scratch']
  %s0 = inlined_call_operand.vmem [shape: f32[4,16,256], index: 0, kind: input, shape index: {}]
  %s1 = inlined_call_operand.vmem [shape: f32[256,256], index: 1, kind: input, shape index: {}]
  %s2 = inlined_call_operand.vmem [shape: f32[1,256], index: 2, kind: input, shape index: {}]
  %s3 = inlined_call_operand.vmem [shape: f32[768,256], index: 3, kind: input, shape index: {}]
  %s4 = inlined_call_operand.vmem [shape: f32[1,256], index: 4, kind: input, shape index: {}]
  %s5 = inlined_call_operand.hbm [shape: f32[128,128], index: 5, kind: input, shape index: {}]
  %s6 = inlined_call_operand.vmem [shape: f32[1,128], index: 6, kind: input, shape index: {}]
  %s7 = inlined_call_operand.hbm [shape: f32[384,128], index: 7, kind: input, shape index: {}]
  %s8 = inlined_call_operand.vmem [shape: f32[1,128], index: 8, kind: input, shape index: {}]
  %s9 = inlined_call_operand.vmem [shape: f32[256,128], index: 9, kind: input, shape index: {}]
  %s10 = inlined_call_operand.vmem [shape: f32[8,16], index: 10, kind: input, shape index: {}]
  %s11 = inlined_call_operand.vmem [shape: f32[4,8], index: 11, kind: input, shape index: {}]
  %s12 = inlined_call_operand.vmem [shape: f32[4,4,128], index: 12, kind: output, shape index: {}]
  %s13 = sld [smem:[#allocation0]]
  $region89: #{seq_net_forward.1} parent=0
    _
  %s15 = ssub.s32 1, %s13
  %s16 = scalar_select 0, %s15, %s13
  $region1: #{seq_net_forward.1} parent=0
    #allocation2 [shape = 'u8[65536]{0}', space=vmem, size = 0x10000, scoped, tag = 'input window, operand 5, single buffered']
    #allocation3 [shape = 's32[2]{0}', space=sflag, size = 0x8, scoped, tag = 'scoped memory for seq_net_forward.1']
    #allocation4 [shape = 'u8[196608]{0}', space=vmem, size = 0x30000, scoped, tag = 'input window, operand 7, single buffered']
    #allocation5 [shape = 's32[1]{0}', space=sflag, size = 0x4, scoped, tag = 'scoped memory for seq_net_forward.1']
    %17 = vsyncpa [#allocation3], 0
    %18 = vsyncpa [#allocation5], 0
    loop: start=0, step=1, limit=6
    $region2: #{seq_net_forward.1} parent=1 // loop_pre_header
      _
    $region3: #{seq_net_forward.1} parent=1 // loop_header
      %s20 = sphi 0, %s24
      %p21 = scmp.ge.s32.totalorder %s20, 6
      %s30 = sphi 0, %s32
      %s33 = sphi 0, %s30
      %s34 = sphi 0, %s33
      %s50 = sphi 0, %s34
      %s54 = sphi 0, %s54
      %s56 = sphi 0, %s54
      %s57 = sphi 0, %s56
      %s71 = sphi 0, %s57
      %s75 = sphi 0, %s75
      %s77 = sphi 0, %s75
      %s78 = sphi 0, %s77
      %s92 = sphi 0, %s78
      %s96 = sphi 0, %s96
      %s98 = sphi 0, %s96
      %s99 = sphi 0, %s98
      %s113 = sphi 0, %s99
      %s117 = sphi 0, %s117
      %s119 = sphi 0, %s117
      %s120 = sphi 0, %s119
      %s134 = sphi 0, %s120
      %s138 = sphi 0, %s138
      %s140 = sphi 0, %s138
      %s141 = sphi 0, %s140
      %s155 = sphi 0, %s141
      %s159 = sphi 0, %s159
      %s161 = sphi 0, %s159
      %s162 = sphi 0, %s161
      %s176 = sphi 0, %s162
      %s180 = sphi 0, %s180
      %s182 = sphi 0, %s180
      %s183 = sphi 0, %s182
      %s197 = sphi 0, %s183
      %s201 = sphi 0, %s201
      %s203 = sphi 0, %s201
      %s204 = sphi 0, %s203
      %s218 = sphi 0, %s204
      %s222 = sphi 0, %s222
      %s224 = sphi 0, %s222
      %s225 = sphi 0, %s224
      %s239 = sphi 0, %s225
      %s243 = sphi 0, %s243
      %s245 = sphi 0, %s243
      %s246 = sphi 0, %s245
      %s260 = sphi 0, %s246
      %s264 = sphi 0, %s264
      %s266 = sphi 0, %s264
      %s267 = sphi 0, %s266
      %s281 = sphi 0, %s267
      %s287 = sphi 0, %s289
      %s290 = sphi 0, %s287
      %s291 = sphi 0, %s290
      %s307 = sphi 0, %s291
    $region4: #{seq_net_forward.1} parent=1 // loop_header_branch
      %23 = sbr.rel (%p21) target = $region8
    $region5: #{seq_net_forward.1} parent=1 // loop_body
      %s25 = ssub.s32 %s20, 1
      %s26 = ssub.s32 %s20, 2
      %s27 = sadd.s32 %s20, 1
      %s28 = ssub.s32 %s20, %s27
      %p29 = scmp.eq.s32.totalorder %s28, 0
      %s31 = sadd.s32 %s30, 1
      %s32 = scalar_select %p29, %s30, %s31
      %p35 = pneg %p29
      %p36 = scmp.eq.s32.totalorder %s20, 3
      %p37 = por %p35, %p36
      %p38 = scmp.ne.s32.totalorder %s30, %s33
      %p39 = scmp.eq.s32.totalorder %s20, 0
      %p40 = por %p38, %p39
      %p41 = scmp.ne.s32.totalorder %s30, %s33
      %p42 = scmp.eq.s32.totalorder %s25, 3
      %p43 = por %p41, %p42
      %p44 = scmp.ne.s32.totalorder %s33, %s34
      %p45 = scmp.eq.s32.totalorder %s25, 0
      %p46 = por %p44, %p45
      %p47 = scmp.ne.s32.totalorder %s33, %s34
      %p48 = scmp.eq.s32.totalorder %s26, 3
      %p49 = por %p47, %p48
      %p51 = scmp.ne.s32.totalorder %s34, %s50
      %p52 = scmp.eq.s32.totalorder %s26, 0
      %p53 = por %p51, %p52
      %s55 = sadd.s32 %s54, 1
      %p58 = scmp.eq.s32.totalorder %s20, 3
      %p59 = scmp.ne.s32.totalorder %s54, %s56
      %p60 = scmp.eq.s32.totalorder %s20, 0
      %p61 = por %p59, %p60
      %p62 = scmp.ne.s32.totalorder %s54, %s56
      %p63 = scmp.eq.s32.totalorder %s25, 3
      %p64 = por %p62, %p63
      %p65 = scmp.ne.s32.totalorder %s56, %s57
      %p66 = scmp.eq.s32.totalorder %s25, 0
      %p67 = por %p65, %p66
      %p68 = scmp.ne.s32.totalorder %s56, %s57
      %p69 = scmp.eq.s32.totalorder %s26, 3
      %p70 = por %p68, %p69
      %p72 = scmp.ne.s32.totalorder %s57, %s71
      %p73 = scmp.eq.s32.totalorder %s26, 0
      %p74 = por %p72, %p73
      %s76 = sadd.s32 %s75, 1
      %p79 = scmp.eq.s32.totalorder %s20, 3
      %p80 = scmp.ne.s32.totalorder %s75, %s77
      %p81 = scmp.eq.s32.totalorder %s20, 0
      %p82 = por %p80, %p81
      %p83 = scmp.ne.s32.totalorder %s75, %s77
      %p84 = scmp.eq.s32.totalorder %s25, 3
      %p85 = por %p83, %p84
      %p86 = scmp.ne.s32.totalorder %s77, %s78
      %p87 = scmp.eq.s32.totalorder %s25, 0
      %p88 = por %p86, %p87
      %p89 = scmp.ne.s32.totalorder %s77, %s78
      %p90 = scmp.eq.s32.totalorder %s26, 3
      %p91 = por %p89, %p90
      %p93 = scmp.ne.s32.totalorder %s78, %s92
      %p94 = scmp.eq.s32.totalorder %s26, 0
      %p95 = por %p93, %p94
      %s97 = sadd.s32 %s96, 1
      %p100 = scmp.eq.s32.totalorder %s20, 3
      %p101 = scmp.ne.s32.totalorder %s96, %s98
      %p102 = scmp.eq.s32.totalorder %s20, 0
      %p103 = por %p101, %p102
      %p104 = scmp.ne.s32.totalorder %s96, %s98
      %p105 = scmp.eq.s32.totalorder %s25, 3
      %p106 = por %p104, %p105
      %p107 = scmp.ne.s32.totalorder %s98, %s99
      %p108 = scmp.eq.s32.totalorder %s25, 0
      %p109 = por %p107, %p108
      %p110 = scmp.ne.s32.totalorder %s98, %s99
      %p111 = scmp.eq.s32.totalorder %s26, 3
      %p112 = por %p110, %p111
      %p114 = scmp.ne.s32.totalorder %s99, %s113
      %p115 = scmp.eq.s32.totalorder %s26, 0
      %p116 = por %p114, %p115
      %s118 = sadd.s32 %s117, 1
      %p121 = scmp.eq.s32.totalorder %s20, 3
      %p122 = scmp.ne.s32.totalorder %s117, %s119
      %p123 = scmp.eq.s32.totalorder %s20, 0
      %p124 = por %p122, %p123
      %p125 = scmp.ne.s32.totalorder %s117, %s119
      %p126 = scmp.eq.s32.totalorder %s25, 3
      %p127 = por %p125, %p126
      %p128 = scmp.ne.s32.totalorder %s119, %s120
      %p129 = scmp.eq.s32.totalorder %s25, 0
      %p130 = por %p128, %p129
      %p131 = scmp.ne.s32.totalorder %s119, %s120
      %p132 = scmp.eq.s32.totalorder %s26, 3
      %p133 = por %p131, %p132
      %p135 = scmp.ne.s32.totalorder %s120, %s134
      %p136 = scmp.eq.s32.totalorder %s26, 0
      %p137 = por %p135, %p136
      %s139 = sadd.s32 %s138, 1
      %p142 = scmp.eq.s32.totalorder %s20, 3
      %p143 = scmp.ne.s32.totalorder %s138, %s140
      %p144 = scmp.eq.s32.totalorder %s20, 0
      %p145 = por %p143, %p144
      %p146 = scmp.ne.s32.totalorder %s138, %s140
      %p147 = scmp.eq.s32.totalorder %s25, 3
      %p148 = por %p146, %p147
      %p149 = scmp.ne.s32.totalorder %s140, %s141
      %p150 = scmp.eq.s32.totalorder %s25, 0
      %p151 = por %p149, %p150
      %p152 = scmp.ne.s32.totalorder %s140, %s141
      %p153 = scmp.eq.s32.totalorder %s26, 3
      %p154 = por %p152, %p153
      %p156 = scmp.ne.s32.totalorder %s141, %s155
      %p157 = scmp.eq.s32.totalorder %s26, 0
      %p158 = por %p156, %p157
      %s160 = sadd.s32 %s159, 1
      %p163 = scmp.eq.s32.totalorder %s20, 3
      %p164 = scmp.ne.s32.totalorder %s159, %s161
      %p165 = scmp.eq.s32.totalorder %s20, 0
      %p166 = por %p164, %p165
      %p167 = scmp.ne.s32.totalorder %s159, %s161
      %p168 = scmp.eq.s32.totalorder %s25, 3
      %p169 = por %p167, %p168
      %p170 = scmp.ne.s32.totalorder %s161, %s162
      %p171 = scmp.eq.s32.totalorder %s25, 0
      %p172 = por %p170, %p171
      %p173 = scmp.ne.s32.totalorder %s161, %s162
      %p174 = scmp.eq.s32.totalorder %s26, 3
      %p175 = por %p173, %p174
      %p177 = scmp.ne.s32.totalorder %s162, %s176
      %p178 = scmp.eq.s32.totalorder %s26, 0
      %p179 = por %p177, %p178
      %s181 = sadd.s32 %s180, 1
      %p184 = scmp.eq.s32.totalorder %s20, 3
      %p185 = scmp.ne.s32.totalorder %s180, %s182
      %p186 = scmp.eq.s32.totalorder %s20, 0
      %p187 = por %p185, %p186
      %p188 = scmp.ne.s32.totalorder %s180, %s182
      %p189 = scmp.eq.s32.totalorder %s25, 3
      %p190 = por %p188, %p189
      %p191 = scmp.ne.s32.totalorder %s182, %s183
      %p192 = scmp.eq.s32.totalorder %s25, 0
      %p193 = por %p191, %p192
      %p194 = scmp.ne.s32.totalorder %s182, %s183
      %p195 = scmp.eq.s32.totalorder %s26, 3
      %p196 = por %p194, %p195
      %p198 = scmp.ne.s32.totalorder %s183, %s197
      %p199 = scmp.eq.s32.totalorder %s26, 0
      %p200 = por %p198, %p199
      %s202 = sadd.s32 %s201, 1
      %p205 = scmp.eq.s32.totalorder %s20, 3
      %p206 = scmp.ne.s32.totalorder %s201, %s203
      %p207 = scmp.eq.s32.totalorder %s20, 0
      %p208 = por %p206, %p207
      %p209 = scmp.ne.s32.totalorder %s201, %s203
      %p210 = scmp.eq.s32.totalorder %s25, 3
      %p211 = por %p209, %p210
      %p212 = scmp.ne.s32.totalorder %s203, %s204
      %p213 = scmp.eq.s32.totalorder %s25, 0
      %p214 = por %p212, %p213
      %p215 = scmp.ne.s32.totalorder %s203, %s204
      %p216 = scmp.eq.s32.totalorder %s26, 3
      %p217 = por %p215, %p216
      %p219 = scmp.ne.s32.totalorder %s204, %s218
      %p220 = scmp.eq.s32.totalorder %s26, 0
      %p221 = por %p219, %p220
      %s223 = sadd.s32 %s222, 1
      %p226 = scmp.eq.s32.totalorder %s20, 3
      %p227 = scmp.ne.s32.totalorder %s222, %s224
      %p228 = scmp.eq.s32.totalorder %s20, 0
      %p229 = por %p227, %p228
      %p230 = scmp.ne.s32.totalorder %s222, %s224
      %p231 = scmp.eq.s32.totalorder %s25, 3
      %p232 = por %p230, %p231
      %p233 = scmp.ne.s32.totalorder %s224, %s225
      %p234 = scmp.eq.s32.totalorder %s25, 0
      %p235 = por %p233, %p234
      %p236 = scmp.ne.s32.totalorder %s224, %s225
      %p237 = scmp.eq.s32.totalorder %s26, 3
      %p238 = por %p236, %p237
      %p240 = scmp.ne.s32.totalorder %s225, %s239
      %p241 = scmp.eq.s32.totalorder %s26, 0
      %p242 = por %p240, %p241
      %s244 = sadd.s32 %s243, 1
      %p247 = scmp.eq.s32.totalorder %s20, 3
      %p248 = scmp.ne.s32.totalorder %s243, %s245
      %p249 = scmp.eq.s32.totalorder %s20, 0
      %p250 = por %p248, %p249
      %p251 = scmp.ne.s32.totalorder %s243, %s245
      %p252 = scmp.eq.s32.totalorder %s25, 3
      %p253 = por %p251, %p252
      %p254 = scmp.ne.s32.totalorder %s245, %s246
      %p255 = scmp.eq.s32.totalorder %s25, 0
      %p256 = por %p254, %p255
      %p257 = scmp.ne.s32.totalorder %s245, %s246
      %p258 = scmp.eq.s32.totalorder %s26, 3
      %p259 = por %p257, %p258
      %p261 = scmp.ne.s32.totalorder %s246, %s260
      %p262 = scmp.eq.s32.totalorder %s26, 0
      %p263 = por %p261, %p262
      %s265 = sadd.s32 %s264, 1
      %p268 = scmp.eq.s32.totalorder %s20, 3
      %p269 = scmp.ne.s32.totalorder %s264, %s266
      %p270 = scmp.eq.s32.totalorder %s20, 0
      %p271 = por %p269, %p270
      %p272 = scmp.ne.s32.totalorder %s264, %s266
      %p273 = scmp.eq.s32.totalorder %s25, 3
      %p274 = por %p272, %p273
      %p275 = scmp.ne.s32.totalorder %s266, %s267
      %p276 = scmp.eq.s32.totalorder %s25, 0
      %p277 = por %p275, %p276
      %p278 = scmp.ne.s32.totalorder %s266, %s267
      %p279 = scmp.eq.s32.totalorder %s26, 3
      %p280 = por %p278, %p279
      %p282 = scmp.ne.s32.totalorder %s267, %s281
      %p283 = scmp.eq.s32.totalorder %s26, 0
      %p284 = por %p282, %p283
      %s285 = ssub.s32 %s20, %s27
      %p286 = scmp.eq.s32.totalorder %s285, 0
      %s288 = sadd.s32 %s287, 1
      %s289 = scalar_select %p286, %s287, %s288
      %p292 = pneg %p286
      %p293 = scmp.eq.s32.totalorder %s20, 3
      %p294 = por %p292, %p293
      %p295 = scmp.ne.s32.totalorder %s287, %s290
      %p296 = scmp.eq.s32.totalorder %s20, 0
      %p297 = por %p295, %p296
      %p298 = scmp.ne.s32.totalorder %s287, %s290
      %p299 = scmp.eq.s32.totalorder %s25, 3
      %p300 = por %p298, %p299
      %p301 = scmp.ne.s32.totalorder %s290, %s291
      %p302 = scmp.eq.s32.totalorder %s25, 0
      %p303 = por %p301, %p302
      %p304 = scmp.ne.s32.totalorder %s290, %s291
      %p305 = scmp.eq.s32.totalorder %s26, 3
      %p306 = por %p304, %p305
      %p308 = scmp.ne.s32.totalorder %s291, %s307
      %p309 = scmp.eq.s32.totalorder %s26, 0
      %p310 = por %p308, %p309
      %p311 = scmp.le.s32.totalorder 1, %s20
      %p312 = scmp.lt.s32.totalorder %s20, 5
      %p313 = pnand %p311, %p312
      %p314 = pneg %p313
      // Predicated region
      $region9: #{seq_net_forward.1} parent=5 // pred_check
        _
      $region10: #{seq_net_forward.1} parent=5 // pred_check_branch
        %316 = sbr.rel (%p313) target = $region12
      $region11: #{seq_net_forward.1} parent=5 // pred_region
        %s317 = ssub.s32 %s20, 1
        // Predicated region
        $region13: #{seq_net_forward.1} parent=11 // pred_check
          %p318 = pneg %p67
        $region14: #{seq_net_forward.1} parent=11 // pred_check_branch
          %320 = sbr.rel (%p318) target = $region16
        $region15: #{seq_net_forward.1} parent=11 // pred_region
          _
        $region16: #{seq_net_forward.1} parent=11 // pred_fallthru
          _
        // Predicated region
        $region17: #{seq_net_forward.1} parent=11 // pred_check
          %p321 = pneg %p88
        $region18: #{seq_net_forward.1} parent=11 // pred_check_branch
          %323 = sbr.rel (%p321) target = $region20
        $region19: #{seq_net_forward.1} parent=11 // pred_region
          _
        $region20: #{seq_net_forward.1} parent=11 // pred_fallthru
          _
        // Predicated region
        $region21: #{seq_net_forward.1} parent=11 // pred_check
          %p324 = pneg %p109
        $region22: #{seq_net_forward.1} parent=11 // pred_check_branch
          %326 = sbr.rel (%p324) target = $region24
        $region23: #{seq_net_forward.1} parent=11 // pred_region
          _
        $region24: #{seq_net_forward.1} parent=11 // pred_fallthru
          _
        // Predicated region
        $region25: #{seq_net_forward.1} parent=11 // pred_check
          %p327 = pneg %p130
        $region26: #{seq_net_forward.1} parent=11 // pred_check_branch
          %329 = sbr.rel (%p327) target = $region28
        $region27: #{seq_net_forward.1} parent=11 // pred_region
          _
        $region28: #{seq_net_forward.1} parent=11 // pred_fallthru
          _
        // Predicated region
        $region29: #{seq_net_forward.1} parent=11 // pred_check
          %p330 = pneg %p151
        $region30: #{seq_net_forward.1} parent=11 // pred_check_branch
          %332 = sbr.rel (%p330) target = $region32
        $region31: #{seq_net_forward.1} parent=11 // pred_region
          %s334 = ssub.s32 2048, 2048
          %335 = vsyncadd [#allocation3], %s334
          %s336 = sshll.u32 [#allocation2], 4
          %s337 = int_to_ptr.vmem [resolvable:$true] %s336
          %342 = dma.hbm_to_vmem [thread:$0]  %s5, 2048, %s337, [#allocation3], 128, 128, 8
        $region32: #{seq_net_forward.1} parent=11 // pred_fallthru
          _
        // Predicated region
        $region33: #{seq_net_forward.1} parent=11 // pred_check
          %p343 = pneg %p172
        $region34: #{seq_net_forward.1} parent=11 // pred_check_branch
          %345 = sbr.rel (%p343) target = $region36
        $region35: #{seq_net_forward.1} parent=11 // pred_region
          _
        $region36: #{seq_net_forward.1} parent=11 // pred_fallthru
          _
        // Predicated region
        $region37: #{seq_net_forward.1} parent=11 // pred_check
          %p346 = pneg %p193
        $region38: #{seq_net_forward.1} parent=11 // pred_check_branch
          %348 = sbr.rel (%p346) target = $region40
        $region39: #{seq_net_forward.1} parent=11 // pred_region
          %s350 = ssub.s32 6144, 6144
          %351 = vsyncadd [#allocation5], %s350
          %s352 = sshll.u32 [#allocation4], 4
          %s353 = int_to_ptr.vmem [resolvable:$true] %s352
          %358 = dma.hbm_to_vmem [thread:$0]  %s7, 6144, %s353, [#allocation5], 128, 128, 8
        $region40: #{seq_net_forward.1} parent=11 // pred_fallthru
          _
        // Predicated region
        $region41: #{seq_net_forward.1} parent=11 // pred_check
          %p359 = pneg %p214
        $region42: #{seq_net_forward.1} parent=11 // pred_check_branch
          %361 = sbr.rel (%p359) target = $region44
        $region43: #{seq_net_forward.1} parent=11 // pred_region
          _
        $region44: #{seq_net_forward.1} parent=11 // pred_fallthru
          _
        // Predicated region
        $region45: #{seq_net_forward.1} parent=11 // pred_check
          %p362 = pneg %p235
        $region46: #{seq_net_forward.1} parent=11 // pred_check_branch
          %364 = sbr.rel (%p362) target = $region48
        $region47: #{seq_net_forward.1} parent=11 // pred_region
          _
        $region48: #{seq_net_forward.1} parent=11 // pred_fallthru
          _
        // Predicated region
        $region49: #{seq_net_forward.1} parent=11 // pred_check
          %p365 = pneg %p256
        $region50: #{seq_net_forward.1} parent=11 // pred_check_branch
          %367 = sbr.rel (%p365) target = $region52
        $region51: #{seq_net_forward.1} parent=11 // pred_region
          _
        $region52: #{seq_net_forward.1} parent=11 // pred_fallthru
          _
        // Predicated region
        $region53: #{seq_net_forward.1} parent=11 // pred_check
          %p368 = pneg %p277
        $region54: #{seq_net_forward.1} parent=11 // pred_check_branch
          %370 = sbr.rel (%p368) target = $region56
        $region55: #{seq_net_forward.1} parent=11 // pred_region
          _
        $region56: #{seq_net_forward.1} parent=11 // pred_fallthru
          _
      $region12: #{seq_net_forward.1} parent=5 // pred_fallthru
        _
      %p371 = scmp.lt.s32.totalorder %s20, 4
      // Predicated region
      $region57: #{seq_net_forward.1} parent=5 // pred_check
        %p372 = pneg %p371
      $region58: #{seq_net_forward.1} parent=5 // pred_check_branch
        %374 = sbr.rel (%p372) target = $region60
      $region59: #{seq_net_forward.1} parent=5 // pred_region
        // Predicated region
        $region61: #{seq_net_forward.1} parent=59 // pred_check
          %p375 = pneg %p40
        $region62: #{seq_net_forward.1} parent=59 // pred_check_branch
          %377 = sbr.rel (%p375) target = $region64
        $region63: #{seq_net_forward.1} parent=59 // pred_region
          %p378 = scmp.lt.s32.totalorder %s20, 3
          %s379 = scalar_select %p378, %s20, 3
          %s380 = smul.addr %s379, 4
          %s381 = smul.addr %s380, 8
          %s382 = scalar_lea.vmem %s0, %s381
        $region64: #{seq_net_forward.1} parent=59 // pred_fallthru
          _
      $region60: #{seq_net_forward.1} parent=5 // pred_fallthru
        _
      %p383 = scmp.le.s32.totalorder 1, %s20
      %p384 = scmp.lt.s32.totalorder %s20, 5
      %p385 = pnand %p383, %p384
      %p386 = pneg %p385
      // Predicated region
      $region65: #{seq_net_forward.1} parent=5 // pred_check
        _
      $region66: #{seq_net_forward.1} parent=5 // pred_check_branch
        %388 = sbr.rel (%p385) target = $region68
      $region67: #{seq_net_forward.1} parent=5 // pred_region
        %s389 = ssub.s32 %s20, 1
        // Predicated region
        $region69: #{seq_net_forward.1} parent=67 // pred_check
          %p390 = pneg %p151
        $region70: #{seq_net_forward.1} parent=67 // pred_check_branch
          %392 = sbr.rel (%p390) target = $region72
        $region71: #{seq_net_forward.1} parent=67 // pred_region
          %393 = dma.done [#allocation3], 2048
        $region72: #{seq_net_forward.1} parent=67 // pred_fallthru
          _
        // Predicated region
        $region73: #{seq_net_forward.1} parent=67 // pred_check
          %p394 = pneg %p193
        $region74: #{seq_net_forward.1} parent=67 // pred_check_branch
          %396 = sbr.rel (%p394) target = $region76
        $region75: #{seq_net_forward.1} parent=67 // pred_region
          %397 = dma.done [#allocation5], 6144
        $region76: #{seq_net_forward.1} parent=67 // pred_fallthru
          _
        %p398 = scmp.lt.s32.totalorder %s25, 3
        %s399 = scalar_select %p398, %s25, 3
        %s400 = smul.addr %s399, 4
        %s401 = smul.addr %s400, 8
        %s402 = scalar_lea.vmem %s0, %s401
        %p403 = pneg %p46
        %p404 = pneg %p43
        %p405 = pneg %p67
        %p406 = pneg %p64
        %p407 = pneg %p88
        %p408 = pneg %p85
        %p409 = pneg %p109
        %p410 = pneg %p106
        %p411 = pneg %p130
        %p412 = pneg %p127
        %p413 = pneg %p151
        %p414 = pneg %p148
        %p415 = pneg %p172
        %p416 = pneg %p169
        %p417 = pneg %p193
        %p418 = pneg %p190
        %p419 = pneg %p214
        %p420 = pneg %p211
        %p421 = pneg %p235
        %p422 = pneg %p232
        %p423 = pneg %p256
        %p424 = pneg %p253
        %p425 = pneg %p277
        %p426 = pneg %p274
        %p427 = pneg %p303
        %p428 = pneg %p300
        %p429 = scmp.lt.s32.totalorder %s25, 3
        %s430 = scalar_select %p429, %s25, 3
        %s431 = smul.addr %s430, 4
        %s432 = scalar_lea.vmem %s12, %s431
        %p433 = scmp.lt.s32.totalorder %s25, 3
        %s434 = scalar_select %p433, %s25, 3
        %s435 = smul.addr %s434, 4
        %s436 = smul.addr %s435, 8
        %s437 = scalar_lea.vmem %s0, %s436
        %p438 = scmp.lt.s32.totalorder %s25, 3
        %s439 = scalar_select %p438, %s25, 3
        %s440 = smul.addr %s439, 4
        %s441 = scalar_lea.vmem %s12, %s440
        %v442 = vld [vmem:[%s437] sm:$0xff]
        %v443 = vld [vmem:[%s437 + $0x8] sm:$0xff]
        %v444 = vld [vmem:[%s437 + $0x10] sm:$0xff]
        %v445 = vld [vmem:[%s437 + $0x18] sm:$0xff]
        %v446 = vld [vmem:[%s1] sm:$0xff]
        %v447 = vld [vmem:[%s1 + $0x8] sm:$0xff]
        %v448 = vld [vmem:[%s1 + $0x10] sm:$0xff]
        %v449 = vld [vmem:[%s1 + $0x18] sm:$0xff]
        %v450 = vld [vmem:[%s1 + $0x20] sm:$0xff]
        %v451 = vld [vmem:[%s1 + $0x28] sm:$0xff]
        %v452 = vld [vmem:[%s1 + $0x30] sm:$0xff]
        %v453 = vld [vmem:[%s1 + $0x38] sm:$0xff]
        %v454 = vld [vmem:[%s1 + $0x40] sm:$0xff]
        %v455 = vld [vmem:[%s1 + $0x48] sm:$0xff]
        %v456 = vld [vmem:[%s1 + $0x50] sm:$0xff]
        %v457 = vld [vmem:[%s1 + $0x58] sm:$0xff]
        %v458 = vld [vmem:[%s1 + $0x60] sm:$0xff]
        %v459 = vld [vmem:[%s1 + $0x68] sm:$0xff]
        %v460 = vld [vmem:[%s1 + $0x70] sm:$0xff]
        %v461 = vld [vmem:[%s1 + $0x78] sm:$0xff]
        %v462 = vld [vmem:[%s1 + $0x80] sm:$0xff]
        %v463 = vld [vmem:[%s1 + $0x88] sm:$0xff]
        %v464 = vld [vmem:[%s1 + $0x90] sm:$0xff]
        %v465 = vld [vmem:[%s1 + $0x98] sm:$0xff]
        %v466 = vld [vmem:[%s1 + $0xa0] sm:$0xff]
        %v467 = vld [vmem:[%s1 + $0xa8] sm:$0xff]
        %v468 = vld [vmem:[%s1 + $0xb0] sm:$0xff]
        %v469 = vld [vmem:[%s1 + $0xb8] sm:$0xff]
        %v470 = vld [vmem:[%s1 + $0xc0] sm:$0xff]
        %v471 = vld [vmem:[%s1 + $0xc8] sm:$0xff]
        %v472 = vld [vmem:[%s1 + $0xd0] sm:$0xff]
        %v473 = vld [vmem:[%s1 + $0xd8] sm:$0xff]
        %v474 = vld [vmem:[%s1 + $0xe0] sm:$0xff]
        %v475 = vld [vmem:[%s1 + $0xe8] sm:$0xff]
        %v476 = vld [vmem:[%s1 + $0xf0] sm:$0xff]
        %v477 = vld [vmem:[%s1 + $0xf8] sm:$0xff]
        %v478 = vld [vmem:[%s1 + $0x100] sm:$0xff]
        %v479 = vld [vmem:[%s1 + $0x108] sm:$0xff]
        %v480 = vld [vmem:[%s1 + $0x110] sm:$0xff]
        %v481 = vld [vmem:[%s1 + $0x118] sm:$0xff]
        %v482 = vld [vmem:[%s1 + $0x120] sm:$0xff]
        %v483 = vld [vmem:[%s1 + $0x128] sm:$0xff]
        %v484 = vld [vmem:[%s1 + $0x130] sm:$0xff]
        %v485 = vld [vmem:[%s1 + $0x138] sm:$0xff]
        %v486 = vld [vmem:[%s1 + $0x140] sm:$0xff]
        %v487 = vld [vmem:[%s1 + $0x148] sm:$0xff]
        %v488 = vld [vmem:[%s1 + $0x150] sm:$0xff]
        %v489 = vld [vmem:[%s1 + $0x158] sm:$0xff]
        %v490 = vld [vmem:[%s1 + $0x160] sm:$0xff]
        %v491 = vld [vmem:[%s1 + $0x168] sm:$0xff]
        %v492 = vld [vmem:[%s1 + $0x170] sm:$0xff]
        %v493 = vld [vmem:[%s1 + $0x178] sm:$0xff]
        %v494 = vld [vmem:[%s1 + $0x180] sm:$0xff]
        %v495 = vld [vmem:[%s1 + $0x188] sm:$0xff]
        %v496 = vld [vmem:[%s1 + $0x190] sm:$0xff]
        %v497 = vld [vmem:[%s1 + $0x198] sm:$0xff]
        %v498 = vld [vmem:[%s1 + $0x1a0] sm:$0xff]
        %v499 = vld [vmem:[%s1 + $0x1a8] sm:$0xff]
        %v500 = vld [vmem:[%s1 + $0x1b0] sm:$0xff]
        %v501 = vld [vmem:[%s1 + $0x1b8] sm:$0xff]
        %v502 = vld [vmem:[%s1 + $0x1c0] sm:$0xff]
        %v503 = vld [vmem:[%s1 + $0x1c8] sm:$0xff]
        %v504 = vld [vmem:[%s1 + $0x1d0] sm:$0xff]
        %v505 = vld [vmem:[%s1 + $0x1d8] sm:$0xff]
        %v506 = vld [vmem:[%s1 + $0x1e0] sm:$0xff]
        %v507 = vld [vmem:[%s1 + $0x1e8] sm:$0xff]
        %v508 = vld [vmem:[%s1 + $0x1f0] sm:$0xff]
        %v509 = vld [vmem:[%s1 + $0x1f8] sm:$0xff]
        %v510 = vld [vmem:[%s2] sm:$0x3]
        %v511 = vld [vmem:[%s3] sm:$0xff]
        %v512 = vld [vmem:[%s3 + $0x8] sm:$0xff]
        %v513 = vld [vmem:[%s3 + $0x10] sm:$0xff]
        %v514 = vld [vmem:[%s3 + $0x18] sm:$0xff]
        %v515 = vld [vmem:[%s3 + $0x20] sm:$0xff]
        %v516 = vld [vmem:[%s3 + $0x28] sm:$0xff]
        %v517 = vld [vmem:[%s3 + $0x30] sm:$0xff]
        %v518 = vld [vmem:[%s3 + $0x38] sm:$0xff]
        %v519 = vld [vmem:[%s3 + $0x40] sm:$0xff]
        %v520 = vld [vmem:[%s3 + $0x48] sm:$0xff]
        %v521 = vld [vmem:[%s3 + $0x50] sm:$0xff]
        %v522 = vld [vmem:[%s3 + $0x58] sm:$0xff]
        %v523 = vld [vmem:[%s3 + $0x60] sm:$0xff]
        %v524 = vld [vmem:[%s3 + $0x68] sm:$0xff]
        %v525 = vld [vmem:[%s3 + $0x70] sm:$0xff]
        %v526 = vld [vmem:[%s3 + $0x78] sm:$0xff]
        %v527 = vld [vmem:[%s3 + $0x80] sm:$0xff]
        %v528 = vld [vmem:[%s3 + $0x88] sm:$0xff]
        %v529 = vld [vmem:[%s3 + $0x90] sm:$0xff]
        %v530 = vld [vmem:[%s3 + $0x98] sm:$0xff]
        %v531 = vld [vmem:[%s3 + $0xa0] sm:$0xff]
        %v532 = vld [vmem:[%s3 + $0xa8] sm:$0xff]
        %v533 = vld [vmem:[%s3 + $0xb0] sm:$0xff]
        %v534 = vld [vmem:[%s3 + $0xb8] sm:$0xff]
        %v535 = vld [vmem:[%s3 + $0xc0] sm:$0xff]
        %v536 = vld [vmem:[%s3 + $0xc8] sm:$0xff]
        %v537 = vld [vmem:[%s3 + $0xd0] sm:$0xff]
        %v538 = vld [vmem:[%s3 + $0xd8] sm:$0xff]
        %v539 = vld [vmem:[%s3 + $0xe0] sm:$0xff]
        %v540 = vld [vmem:[%s3 + $0xe8] sm:$0xff]
        %v541 = vld [vmem:[%s3 + $0xf0] sm:$0xff]
        %v542 = vld [vmem:[%s3 + $0xf8] sm:$0xff]
        %v543 = vld [vmem:[%s3 + $0x100] sm:$0xff]
        %v544 = vld [vmem:[%s3 + $0x108] sm:$0xff]
        %v545 = vld [vmem:[%s3 + $0x110] sm:$0xff]
        %v546 = vld [vmem:[%s3 + $0x118] sm:$0xff]
        %v547 = vld [vmem:[%s3 + $0x120] sm:$0xff]
        %v548 = vld [vmem:[%s3 + $0x128] sm:$0xff]
        %v549 = vld [vmem:[%s3 + $0x130] sm:$0xff]
        %v550 = vld [vmem:[%s3 + $0x138] sm:$0xff]
        %v551 = vld [vmem:[%s3 + $0x140] sm:$0xff]
        %v552 = vld [vmem:[%s3 + $0x148] sm:$0xff]
        %v553 = vld [vmem:[%s3 + $0x150] sm:$0xff]
        %v554 = vld [vmem:[%s3 + $0x158] sm:$0xff]
        %v555 = vld [vmem:[%s3 + $0x160] sm:$0xff]
        %v556 = vld [vmem:[%s3 + $0x168] sm:$0xff]
        %v557 = vld [vmem:[%s3 + $0x170] sm:$0xff]
        %v558 = vld [vmem:[%s3 + $0x178] sm:$0xff]
        %v559 = vld [vmem:[%s3 + $0x180] sm:$0xff]
        %v560 = vld [vmem:[%s3 + $0x188] sm:$0xff]
        %v561 = vld [vmem:[%s3 + $0x190] sm:$0xff]
        %v562 = vld [vmem:[%s3 + $0x198] sm:$0xff]
        %v563 = vld [vmem:[%s3 + $0x1a0] sm:$0xff]
        %v564 = vld [vmem:[%s3 + $0x1a8] sm:$0xff]
        %v565 = vld [vmem:[%s3 + $0x1b0] sm:$0xff]
        %v566 = vld [vmem:[%s3 + $0x1b8] sm:$0xff]
        %v567 = vld [vmem:[%s3 + $0x1c0] sm:$0xff]
        %v568 = vld [vmem:[%s3 + $0x1c8] sm:$0xff]
        %v569 = vld [vmem:[%s3 + $0x1d0] sm:$0xff]
        %v570 = vld [vmem:[%s3 + $0x1d8] sm:$0xff]
        %v571 = vld [vmem:[%s3 + $0x1e0] sm:$0xff]
        %v572 = vld [vmem:[%s3 + $0x1e8] sm:$0xff]
        %v573 = vld [vmem:[%s3 + $0x1f0] sm:$0xff]
        %v574 = vld [vmem:[%s3 + $0x1f8] sm:$0xff]
        %v575 = vld [vmem:[%s3 + $0x200] sm:$0xff]
        %v576 = vld [vmem:[%s3 + $0x208] sm:$0xff]
        %v577 = vld [vmem:[%s3 + $0x210] sm:$0xff]
        %v578 = vld [vmem:[%s3 + $0x218] sm:$0xff]
        %v579 = vld [vmem:[%s3 + $0x220] sm:$0xff]
        %v580 = vld [vmem:[%s3 + $0x228] sm:$0xff]
        %v581 = vld [vmem:[%s3 + $0x230] sm:$0xff]
        %v582 = vld [vmem:[%s3 + $0x238] sm:$0xff]
        %v583 = vld [vmem:[%s3 + $0x240] sm:$0xff]
        %v584 = vld [vmem:[%s3 + $0x248] sm:$0xff]
        %v585 = vld [vmem:[%s3 + $0x250] sm:$0xff]
        %v586 = vld [vmem:[%s3 + $0x258] sm:$0xff]
        %v587 = vld [vmem:[%s3 + $0x260] sm:$0xff]
        %v588 = vld [vmem:[%s3 + $0x268] sm:$0xff]
        %v589 = vld [vmem:[%s3 + $0x270] sm:$0xff]
        %v590 = vld [vmem:[%s3 + $0x278] sm:$0xff]
        %v591 = vld [vmem:[%s3 + $0x280] sm:$0xff]
        %v592 = vld [vmem:[%s3 + $0x288] sm:$0xff]
        %v593 = vld [vmem:[%s3 + $0x290] sm:$0xff]
        %v594 = vld [vmem:[%s3 + $0x298] sm:$0xff]
        %v595 = vld [vmem:[%s3 + $0x2a0] sm:$0xff]
        %v596 = vld [vmem:[%s3 + $0x2a8] sm:$0xff]
        %v597 = vld [vmem:[%s3 + $0x2b0] sm:$0xff]
        %v598 = vld [vmem:[%s3 + $0x2b8] sm:$0xff]
        %v599 = vld [vmem:[%s3 + $0x2c0] sm:$0xff]
        %v600 = vld [vmem:[%s3 + $0x2c8] sm:$0xff]
        %v601 = vld [vmem:[%s3 + $0x2d0] sm:$0xff]
        %v602 = vld [vmem:[%s3 + $0x2d8] sm:$0xff]
        %v603 = vld [vmem:[%s3 + $0x2e0] sm:$0xff]
        %v604 = vld [vmem:[%s3 + $0x2e8] sm:$0xff]
        %v605 = vld [vmem:[%s3 + $0x2f0] sm:$0xff]
        %v606 = vld [vmem:[%s3 + $0x2f8] sm:$0xff]
        %v607 = vld [vmem:[%s3 + $0x300] sm:$0xff]
        %v608 = vld [vmem:[%s3 + $0x308] sm:$0xff]
        %v609 = vld [vmem:[%s3 + $0x310] sm:$0xff]
        %v610 = vld [vmem:[%s3 + $0x318] sm:$0xff]
        %v611 = vld [vmem:[%s3 + $0x320] sm:$0xff]
        %v612 = vld [vmem:[%s3 + $0x328] sm:$0xff]
        %v613 = vld [vmem:[%s3 + $0x330] sm:$0xff]
        %v614 = vld [vmem:[%s3 + $0x338] sm:$0xff]
        %v615 = vld [vmem:[%s3 + $0x340] sm:$0xff]
        %v616 = vld [vmem:[%s3 + $0x348] sm:$0xff]
        %v617 = vld [vmem:[%s3 + $0x350] sm:$0xff]
        %v618 = vld [vmem:[%s3 + $0x358] sm:$0xff]
        %v619 = vld [vmem:[%s3 + $0x360] sm:$0xff]
        %v620 = vld [vmem:[%s3 + $0x368] sm:$0xff]
        %v621 = vld [vmem:[%s3 + $0x370] sm:$0xff]
        %v622 = vld [vmem:[%s3 + $0x378] sm:$0xff]
        %v623 = vld [vmem:[%s3 + $0x380] sm:$0xff]
        %v624 = vld [vmem:[%s3 + $0x388] sm:$0xff]
        %v625 = vld [vmem:[%s3 + $0x390] sm:$0xff]
        %v626 = vld [vmem:[%s3 + $0x398] sm:$0xff]
        %v627 = vld [vmem:[%s3 + $0x3a0] sm:$0xff]
        %v628 = vld [vmem:[%s3 + $0x3a8] sm:$0xff]
        %v629 = vld [vmem:[%s3 + $0x3b0] sm:$0xff]
        %v630 = vld [vmem:[%s3 + $0x3b8] sm:$0xff]
        %v631 = vld [vmem:[%s3 + $0x3c0] sm:$0xff]
        %v632 = vld [vmem:[%s3 + $0x3c8] sm:$0xff]
        %v633 = vld [vmem:[%s3 + $0x3d0] sm:$0xff]
        %v634 = vld [vmem:[%s3 + $0x3d8] sm:$0xff]
        %v635 = vld [vmem:[%s3 + $0x3e0] sm:$0xff]
        %v636 = vld [vmem:[%s3 + $0x3e8] sm:$0xff]
        %v637 = vld [vmem:[%s3 + $0x3f0] sm:$0xff]
        %v638 = vld [vmem:[%s3 + $0x3f8] sm:$0xff]
        %v639 = vld [vmem:[%s3 + $0x400] sm:$0xff]
        %v640 = vld [vmem:[%s3 + $0x408] sm:$0xff]
        %v641 = vld [vmem:[%s3 + $0x410] sm:$0xff]
        %v642 = vld [vmem:[%s3 + $0x418] sm:$0xff]
        %v643 = vld [vmem:[%s3 + $0x420] sm:$0xff]
        %v644 = vld [vmem:[%s3 + $0x428] sm:$0xff]
        %v645 = vld [vmem:[%s3 + $0x430] sm:$0xff]
        %v646 = vld [vmem:[%s3 + $0x438] sm:$0xff]
        %v647 = vld [vmem:[%s3 + $0x440] sm:$0xff]
        %v648 = vld [vmem:[%s3 + $0x448] sm:$0xff]
        %v649 = vld [vmem:[%s3 + $0x450] sm:$0xff]
        %v650 = vld [vmem:[%s3 + $0x458] sm:$0xff]
        %v651 = vld [vmem:[%s3 + $0x460] sm:$0xff]
        %v652 = vld [vmem:[%s3 + $0x468] sm:$0xff]
        %v653 = vld [vmem:[%s3 + $0x470] sm:$0xff]
        %v654 = vld [vmem:[%s3 + $0x478] sm:$0xff]
        %v655 = vld [vmem:[%s3 + $0x480] sm:$0xff]
        %v656 = vld [vmem:[%s3 + $0x488] sm:$0xff]
        %v657 = vld [vmem:[%s3 + $0x490] sm:$0xff]
        %v658 = vld [vmem:[%s3 + $0x498] sm:$0xff]
        %v659 = vld [vmem:[%s3 + $0x4a0] sm:$0xff]
        %v660 = vld [vmem:[%s3 + $0x4a8] sm:$0xff]
        %v661 = vld [vmem:[%s3 + $0x4b0] sm:$0xff]
        %v662 = vld [vmem:[%s3 + $0x4b8] sm:$0xff]
        %v663 = vld [vmem:[%s3 + $0x4c0] sm:$0xff]
        %v664 = vld [vmem:[%s3 + $0x4c8] sm:$0xff]
        %v665 = vld [vmem:[%s3 + $0x4d0] sm:$0xff]
        %v666 = vld [vmem:[%s3 + $0x4d8] sm:$0xff]
        %v667 = vld [vmem:[%s3 + $0x4e0] sm:$0xff]
        %v668 = vld [vmem:[%s3 + $0x4e8] sm:$0xff]
        %v669 = vld [vmem:[%s3 + $0x4f0] sm:$0xff]
        %v670 = vld [vmem:[%s3 + $0x4f8] sm:$0xff]
        %v671 = vld [vmem:[%s3 + $0x500] sm:$0xff]
        %v672 = vld [vmem:[%s3 + $0x508] sm:$0xff]
        %v673 = vld [vmem:[%s3 + $0x510] sm:$0xff]
        %v674 = vld [vmem:[%s3 + $0x518] sm:$0xff]
        %v675 = vld [vmem:[%s3 + $0x520] sm:$0xff]
        %v676 = vld [vmem:[%s3 + $0x528] sm:$0xff]
        %v677 = vld [vmem:[%s3 + $0x530] sm:$0xff]
        %v678 = vld [vmem:[%s3 + $0x538] sm:$0xff]
        %v679 = vld [vmem:[%s3 + $0x540] sm:$0xff]
        %v680 = vld [vmem:[%s3 + $0x548] sm:$0xff]
        %v681 = vld [vmem:[%s3 + $0x550] sm:$0xff]
        %v682 = vld [vmem:[%s3 + $0x558] sm:$0xff]
        %v683 = vld [vmem:[%s3 + $0x560] sm:$0xff]
        %v684 = vld [vmem:[%s3 + $0x568] sm:$0xff]
        %v685 = vld [vmem:[%s3 + $0x570] sm:$0xff]
        %v686 = vld [vmem:[%s3 + $0x578] sm:$0xff]
        %v687 = vld [vmem:[%s3 + $0x580] sm:$0xff]
        %v688 = vld [vmem:[%s3 + $0x588] sm:$0xff]
        %v689 = vld [vmem:[%s3 + $0x590] sm:$0xff]
        %v690 = vld [vmem:[%s3 + $0x598] sm:$0xff]
        %v691 = vld [vmem:[%s3 + $0x5a0] sm:$0xff]
        %v692 = vld [vmem:[%s3 + $0x5a8] sm:$0xff]
        %v693 = vld [vmem:[%s3 + $0x5b0] sm:$0xff]
        %v694 = vld [vmem:[%s3 + $0x5b8] sm:$0xff]
        %v695 = vld [vmem:[%s3 + $0x5c0] sm:$0xff]
        %v696 = vld [vmem:[%s3 + $0x5c8] sm:$0xff]
        %v697 = vld [vmem:[%s3 + $0x5d0] sm:$0xff]
        %v698 = vld [vmem:[%s3 + $0x5d8] sm:$0xff]
        %v699 = vld [vmem:[%s3 + $0x5e0] sm:$0xff]
        %v700 = vld [vmem:[%s3 + $0x5e8] sm:$0xff]
        %v701 = vld [vmem:[%s3 + $0x5f0] sm:$0xff]
        %v702 = vld [vmem:[%s3 + $0x5f8] sm:$0xff]
        %v703 = vld [vmem:[%s4] sm:$0x3]
        %v705 = vlaneseq
        %v706 = vshrl.u32 %v705, 7
        %v707 = vsub.s32 0, %v706
        %v708 = vrot.slane %v510, %v707
        %v709 = vlaneseq
        %v710 = vshrl.u32 %v709, 7
        %v711 = vsub.s32 1, %v710
        %v712 = vrot.slane %v510, %v711
        %715 = vmatprep.subr.mxu0 %v447
        %716 = vmatpush1.msra.mxu0 %v446
        %717 = vmatprep.subr.mxu0 %v449
        %718 = vmatpush1.msra.mxu0 %v448
        %719 = vmatprep.subr.mxu0 %v451
        %720 = vmatpush1.msra.mxu0 %v450
        %721 = vmatprep.subr.mxu0 %v453
        %722 = vmatpush1.msra.mxu0 %v452
        %723 = vmatprep.subr.mxu0 %v455
        %724 = vmatpush1.msra.mxu0 %v454
        %725 = vmatprep.subr.mxu0 %v457
        %726 = vmatpush1.msra.mxu0 %v456
        %727 = vmatprep.subr.mxu0 %v459
        %728 = vmatpush1.msra.mxu0 %v458
        %729 = vmatprep.subr.mxu0 %v461
        %730 = vmatpush1.msra.mxu0 %v460
        %731 = vmatprep.subr.mxu0 %v463
        %732 = vmatpush1.msra.mxu0 %v462
        %733 = vmatprep.subr.mxu0 %v465
        %734 = vmatpush1.msra.mxu0 %v464
        %735 = vmatprep.subr.mxu0 %v467
        %736 = vmatpush1.msra.mxu0 %v466
        %737 = vmatprep.subr.mxu0 %v469
        %738 = vmatpush1.msra.mxu0 %v468
        %739 = vmatprep.subr.mxu0 %v471
        %740 = vmatpush1.msra.mxu0 %v470
        %741 = vmatprep.subr.mxu0 %v473
        %742 = vmatpush1.msra.mxu0 %v472
        %743 = vmatprep.subr.mxu0 %v475
        %744 = vmatpush1.msra.mxu0 %v474
        %745 = vmatprep.subr.mxu0 %v477
        %746 = vmatpush1.msra.mxu0 %v476
        %747 = vmatprep.subr.mxu0 %v479
        %748 = vmatpush1.msra.mxu0 %v478
        %749 = vmatprep.subr.mxu0 %v481
        %750 = vmatpush1.msra.mxu0 %v480
        %751 = vmatprep.subr.mxu0 %v483
        %752 = vmatpush1.msra.mxu0 %v482
        %753 = vmatprep.subr.mxu0 %v485
        %754 = vmatpush1.msra.mxu0 %v484
        %755 = vmatprep.subr.mxu0 %v487
        %756 = vmatpush1.msra.mxu0 %v486
        %757 = vmatprep.subr.mxu0 %v489
        %758 = vmatpush1.msra.mxu0 %v488
        %759 = vmatprep.subr.mxu0 %v491
        %760 = vmatpush1.msra.mxu0 %v490
        %761 = vmatprep.subr.mxu0 %v493
        %762 = vmatpush1.msra.mxu0 %v492
        %763 = vmatprep.subr.mxu0 %v495
        %764 = vmatpush1.msra.mxu0 %v494
        %765 = vmatprep.subr.mxu0 %v497
        %766 = vmatpush1.msra.mxu0 %v496
        %767 = vmatprep.subr.mxu0 %v499
        %768 = vmatpush1.msra.mxu0 %v498
        %769 = vmatprep.subr.mxu0 %v501
        %770 = vmatpush1.msra.mxu0 %v500
        %771 = vmatprep.subr.mxu0 %v503
        %772 = vmatpush1.msra.mxu0 %v502
        %773 = vmatprep.subr.mxu0 %v505
        %774 = vmatpush1.msra.mxu0 %v504
        %775 = vmatprep.subr.mxu0 %v507
        %776 = vmatpush1.msra.mxu0 %v506
        %777 = vmatprep.subr.mxu0 %v509
        %778 = vmatpush1.msra.mxu0 %v508
        %779 = vmatprep.mubr.f32.mxu0 %v443
        %780 = vmatmul.mubr.f32.gmra.mrb[0].mxu0 %v442
        %v781 = vpop.f32.mrb[0].mxu0
        %v782 = vadd.f32 %v708, %v781
        %v783 = vpop.f32.mrb[0].mxu0
        %v784 = vadd.f32 %v712, %v783
        %785 = vmatprep.mubr.f32.mxu0 %v445
        %786 = vmatmul.mubr.f32.gmra.mrb[0].mxu0 %v444
        %v787 = vpop.f32.mrb[0].mxu0
        %v788 = vadd.f32 %v708, %v787
        %v789 = vpop.f32.mrb[0].mxu0
        %v790 = vadd.f32 %v712, %v789
        %791 = vdwg.mxu0
        %v792 = vmax.f32 %v782, 0.0
        %v793 = vmax.f32 %v784, 0.0
        %v794 = vmax.f32 %v788, 0.0
        %v795 = vmax.f32 %v790, 0.0
        %v796 = vlaneseq
        %v797 = vshrl.u32 %v796, 7
        %v798 = vadd.s32 %v797, 8
        %vm799 = vcmp.eq.s32.totalorder %v797, 0
        %vm800 = vcmp.eq.s32.totalorder %v798, 0
        %v801 = vrot.slane %v792, 7
        %v802 = vrot.slane %v793, 7
        %v803 = vrot.slane %v794, 7
        %v804 = vrot.slane %v795, 7
        %vm805 = vcmp.lt.s32.totalorder %v797, 1
        %v806 = vsel %vm805, %v801, %v803
        %v807 = vsel %vm805, %v802, %v804
        %v808 = vsel %vm805, %v803, %v801
        %v809 = vsel %vm805, %v804, %v802
        %v810 = vsel %vm799, 0.0, %v808
        %v811 = vsel %vm799, 0.0, %v809
        %v812 = vsel %vm800, 0.0, %v806
        %v813 = vsel %vm800, 0.0, %v807
        %vm814 = vcmp.eq.s32.totalorder %v797, 15
        %vm815 = vcmp.eq.s32.totalorder %v798, 15
        %v816 = vrot.slane %v792, 1
        %v817 = vrot.slane %v793, 1
        %v818 = vrot.slane %v794, 1
        %v819 = vrot.slane %v795, 1
        %vm820 = vcmp.lt.s32.totalorder %v797, 7
        %v821 = vsel %vm820, %v816, %v818
        %v822 = vsel %vm820, %v817, %v819
        %v823 = vsel %vm820, %v818, %v816
        %v824 = vsel %vm820, %v819, %v817
        %v825 = vsel %vm814, 0.0, %v821
        %v826 = vsel %vm814, 0.0, %v822
        %v827 = vsel %vm815, 0.0, %v823
        %v828 = vsel %vm815, 0.0, %v824
        %v830 = vlaneseq
        %v831 = vshrl.u32 %v830, 7
        %v832 = vsub.s32 0, %v831
        %v833 = vrot.slane %v703, %v832
        %v834 = vlaneseq
        %v835 = vshrl.u32 %v834, 7
        %v836 = vsub.s32 1, %v835
        %v837 = vrot.slane %v703, %v836
        %840 = vmatprep.subr.mxu0 %v512
        %841 = vmatpush1.msra.mxu0 %v511
        %842 = vmatprep.subr.mxu0 %v514
        %843 = vmatpush1.msra.mxu0 %v513
        %844 = vmatprep.subr.mxu0 %v516
        %845 = vmatpush1.msra.mxu0 %v515
        %846 = vmatprep.subr.mxu0 %v518
        %847 = vmatpush1.msra.mxu0 %v517
        %848 = vmatprep.subr.mxu0 %v520
        %849 = vmatpush1.msra.mxu0 %v519
        %850 = vmatprep.subr.mxu0 %v522
        %851 = vmatpush1.msra.mxu0 %v521
        %852 = vmatprep.subr.mxu0 %v524
        %853 = vmatpush1.msra.mxu0 %v523
        %854 = vmatprep.subr.mxu0 %v526
        %855 = vmatpush1.msra.mxu0 %v525
        %856 = vmatprep.subr.mxu0 %v528
        %857 = vmatpush1.msra.mxu0 %v527
        %858 = vmatprep.subr.mxu0 %v530
        %859 = vmatpush1.msra.mxu0 %v529
        %860 = vmatprep.subr.mxu0 %v532
        %861 = vmatpush1.msra.mxu0 %v531
        %862 = vmatprep.subr.mxu0 %v534
        %863 = vmatpush1.msra.mxu0 %v533
        %864 = vmatprep.subr.mxu0 %v536
        %865 = vmatpush1.msra.mxu0 %v535
        %866 = vmatprep.subr.mxu0 %v538
        %867 = vmatpush1.msra.mxu0 %v537
        %868 = vmatprep.subr.mxu0 %v540
        %869 = vmatpush1.msra.mxu0 %v539
        %870 = vmatprep.subr.mxu0 %v542
        %871 = vmatpush1.msra.mxu0 %v541
        %872 = vmatprep.subr.mxu0 %v544
        %873 = vmatpush1.msra.mxu0 %v543
        %874 = vmatprep.subr.mxu0 %v546
        %875 = vmatpush1.msra.mxu0 %v545
        %876 = vmatprep.subr.mxu0 %v548
        %877 = vmatpush1.msra.mxu0 %v547
        %878 = vmatprep.subr.mxu0 %v550
        %879 = vmatpush1.msra.mxu0 %v549
        %880 = vmatprep.subr.mxu0 %v552
        %881 = vmatpush1.msra.mxu0 %v551
        %882 = vmatprep.subr.mxu0 %v554
        %883 = vmatpush1.msra.mxu0 %v553
        %884 = vmatprep.subr.mxu0 %v556
        %885 = vmatpush1.msra.mxu0 %v555
        %886 = vmatprep.subr.mxu0 %v558
        %887 = vmatpush1.msra.mxu0 %v557
        %888 = vmatprep.subr.mxu0 %v560
        %889 = vmatpush1.msra.mxu0 %v559
        %890 = vmatprep.subr.mxu0 %v562
        %891 = vmatpush1.msra.mxu0 %v561
        %892 = vmatprep.subr.mxu0 %v564
        %893 = vmatpush1.msra.mxu0 %v563
        %894 = vmatprep.subr.mxu0 %v566
        %895 = vmatpush1.msra.mxu0 %v565
        %896 = vmatprep.subr.mxu0 %v568
        %897 = vmatpush1.msra.mxu0 %v567
        %898 = vmatprep.subr.mxu0 %v570
        %899 = vmatpush1.msra.mxu0 %v569
        %900 = vmatprep.subr.mxu0 %v572
        %901 = vmatpush1.msra.mxu0 %v571
        %902 = vmatprep.subr.mxu0 %v574
        %903 = vmatpush1.msra.mxu0 %v573
        %904 = vmatprep.mubr.f32.mxu0 %v811
        %905 = vmatmul.mubr.f32.gmra.mrb[0].mxu0 %v810
        %v906 = vpop.f32.mrb[0].mxu0
        %v907 = vadd.f32 %v833, %v906
        %v908 = vpop.f32.mrb[0].mxu0
        %v909 = vadd.f32 %v837, %v908
        %910 = vmatprep.mubr.f32.mxu0 %v813
        %911 = vmatmul.mubr.f32.gmra.mrb[0].mxu0 %v812
        %v912 = vpop.f32.mrb[0].mxu0
        %v913 = vadd.f32 %v833, %v912
        %v914 = vpop.f32.mrb[0].mxu0
        %v915 = vadd.f32 %v837, %v914
        %916 = vdwg.mxu0
        %917 = vmatprep.subr.mxu0 %v576
        %918 = vmatpush1.msra.mxu0 %v575
        %919 = vmatprep.subr.mxu0 %v578
        %920 = vmatpush1.msra.mxu0 %v577
        %921 = vmatprep.subr.mxu0 %v580
        %922 = vmatpush1.msra.mxu0 %v579
        %923 = vmatprep.subr.mxu0 %v582
        %924 = vmatpush1.msra.mxu0 %v581
        %925 = vmatprep.subr.mxu0 %v584
        %926 = vmatpush1.msra.mxu0 %v583
        %927 = vmatprep.subr.mxu0 %v586
        %928 = vmatpush1.msra.mxu0 %v585
        %929 = vmatprep.subr.mxu0 %v588
        %930 = vmatpush1.msra.mxu0 %v587
        %931 = vmatprep.subr.mxu0 %v590
        %932 = vmatpush1.msra.mxu0 %v589
        %933 = vmatprep.subr.mxu0 %v592
        %934 = vmatpush1.msra.mxu0 %v591
        %935 = vmatprep.subr.mxu0 %v594
        %936 = vmatpush1.msra.mxu0 %v593
        %937 = vmatprep.subr.mxu0 %v596
        %938 = vmatpush1.msra.mxu0 %v595
        %939 = vmatprep.subr.mxu0 %v598
        %940 = vmatpush1.msra.mxu0 %v597
        %941 = vmatprep.subr.mxu0 %v600
        %942 = vmatpush1.msra.mxu0 %v599
        %943 = vmatprep.subr.mxu0 %v602
        %944 = vmatpush1.msra.mxu0 %v601
        %945 = vmatprep.subr.mxu0 %v604
        %946 = vmatpush1.msra.mxu0 %v603
        %947 = vmatprep.subr.mxu0 %v606
        %948 = vmatpush1.msra.mxu0 %v605
        %949 = vmatprep.subr.mxu0 %v608
        %950 = vmatpush1.msra.mxu0 %v607
        %951 = vmatprep.subr.mxu0 %v610
        %952 = vmatpush1.msra.mxu0 %v609
        %953 = vmatprep.subr.mxu0 %v612
        %954 = vmatpush1.msra.mxu0 %v611
        %955 = vmatprep.subr.mxu0 %v614
        %956 = vmatpush1.msra.mxu0 %v613
        %957 = vmatprep.subr.mxu0 %v616
        %958 = vmatpush1.msra.mxu0 %v615
        %959 = vmatprep.subr.mxu0 %v618
        %960 = vmatpush1.msra.mxu0 %v617
        %961 = vmatprep.subr.mxu0 %v620
        %962 = vmatpush1.msra.mxu0 %v619
        %963 = vmatprep.subr.mxu0 %v622
        %964 = vmatpush1.msra.mxu0 %v621
        %965 = vmatprep.subr.mxu0 %v624
        %966 = vmatpush1.msra.mxu0 %v623
        %967 = vmatprep.subr.mxu0 %v626
        %968 = vmatpush1.msra.mxu0 %v625
        %969 = vmatprep.subr.mxu0 %v628
        %970 = vmatpush1.msra.mxu0 %v627
        %971 = vmatprep.subr.mxu0 %v630
        %972 = vmatpush1.msra.mxu0 %v629
        %973 = vmatprep.subr.mxu0 %v632
        %974 = vmatpush1.msra.mxu0 %v631
        %975 = vmatprep.subr.mxu0 %v634
        %976 = vmatpush1.msra.mxu0 %v633
        %977 = vmatprep.subr.mxu0 %v636
        %978 = vmatpush1.msra.mxu0 %v635
        %979 = vmatprep.subr.mxu0 %v638
        %980 = vmatpush1.msra.mxu0 %v637
        %981 = vmatprep.mubr.f32.mxu0 %v793
        %982 = vmatmul.mubr.f32.gmra.mrb[0].mxu0 %v792
        %v983 = vpop.f32.mrb[0].mxu0
        %v984 = vadd.f32 %v907, %v983
        %v985 = vpop.f32.mrb[0].mxu0
        %v986 = vadd.f32 %v909, %v985
        %987 = vmatprep.mubr.f32.mxu0 %v795
        %988 = vmatmul.mubr.f32.gmra.mrb[0].mxu0 %v794
        %v989 = vpop.f32.mrb[0].mxu0
        %v990 = vadd.f32 %v913, %v989
        %v991 = vpop.f32.mrb[0].mxu0
        %v992 = vadd.f32 %v915, %v991
        %993 = vdwg.mxu0
        %994 = vmatprep.subr.mxu0 %v640
        %995 = vmatpush1.msra.mxu0 %v639
        %996 = vmatprep.subr.mxu0 %v642
        %997 = vmatpush1.msra.mxu0 %v641
        %998 = vmatprep.subr.mxu0 %v644
        %999 = vmatpush1.msra.mxu0 %v643
        %1000 = vmatprep.subr.mxu0 %v646
        %1001 = vmatpush1.msra.mxu0 %v645
        %1002 = vmatprep.subr.mxu0 %v648
        %1003 = vmatpush1.msra.mxu0 %v647
        %1004 = vmatprep.subr.mxu0 %v650
        %1005 = vmatpush1.msra.mxu0 %v649
        %1006 = vmatprep.subr.mxu0 %v652
        %1007 = vmatpush1.msra.mxu0 %v651
        %1008 = vmatprep.subr.mxu0 %v654
        %1009 = vmatpush1.msra.mxu0 %v653
        %1010 = vmatprep.subr.mxu0 %v656
        %1011 = vmatpush1.msra.mxu0 %v655
        %1012 = vmatprep.subr.mxu0 %v658
        %1013 = vmatpush1.msra.mxu0 %v657
        %1014 = vmatprep.subr.mxu0 %v660
        %1015 = vmatpush1.msra.mxu0 %v659
        %1016 = vmatprep.subr.mxu0 %v662
        %1017 = vmatpush1.msra.mxu0 %v661
        %1018 = vmatprep.subr.mxu0 %v664
        %1019 = vmatpush1.msra.mxu0 %v663
        %1020 = vmatprep.subr.mxu0 %v666
        %1021 = vmatpush1.msra.mxu0 %v665
        %1022 = vmatprep.subr.mxu0 %v668
        %1023 = vmatpush1.msra.mxu0 %v667
        %1024 = vmatprep.subr.mxu0 %v670
        %1025 = vmatpush1.msra.mxu0 %v669
        %1026 = vmatprep.subr.mxu0 %v672
        %1027 = vmatpush1.msra.mxu0 %v671
        %1028 = vmatprep.subr.mxu0 %v674
        %1029 = vmatpush1.msra.mxu0 %v673
        %1030 = vmatprep.subr.mxu0 %v676
        %1031 = vmatpush1.msra.mxu0 %v675
        %1032 = vmatprep.subr.mxu0 %v678
        %1033 = vmatpush1.msra.mxu0 %v677
        %1034 = vmatprep.subr.mxu0 %v680
        %1035 = vmatpush1.msra.mxu0 %v679
        %1036 = vmatprep.subr.mxu0 %v682
        %1037 = vmatpush1.msra.mxu0 %v681
        %1038 = vmatprep.subr.mxu0 %v684
        %1039 = vmatpush1.msra.mxu0 %v683
        %1040 = vmatprep.subr.mxu0 %v686
        %1041 = vmatpush1.msra.mxu0 %v685
        %1042 = vmatprep.subr.mxu0 %v688
        %1043 = vmatpush1.msra.mxu0 %v687
        %1044 = vmatprep.subr.mxu0 %v690
        %1045 = vmatpush1.msra.mxu0 %v689
        %1046 = vmatprep.subr.mxu0 %v692
        %1047 = vmatpush1.msra.mxu0 %v691
        %1048 = vmatprep.subr.mxu0 %v694
        %1049 = vmatpush1.msra.mxu0 %v693
        %1050 = vmatprep.subr.mxu0 %v696
        %1051 = vmatpush1.msra.mxu0 %v695
        %1052 = vmatprep.subr.mxu0 %v698
        %1053 = vmatpush1.msra.mxu0 %v697
        %1054 = vmatprep.subr.mxu0 %v700
        %1055 = vmatpush1.msra.mxu0 %v699
        %1056 = vmatprep.subr.mxu0 %v702
        %1057 = vmatpush1.msra.mxu0 %v701
        %1058 = vmatprep.mubr.f32.mxu0 %v826
        %1059 = vmatmul.mubr.f32.gmra.mrb[0].mxu0 %v825
        %v1060 = vpop.f32.mrb[0].mxu0
        %v1061 = vadd.f32 %v984, %v1060
        %v1062 = vpop.f32.mrb[0].mxu0
        %v1063 = vadd.f32 %v986, %v1062
        %1064 = vmatprep.mubr.f32.mxu0 %v828
        %1065 = vmatmul.mubr.f32.gmra.mrb[0].mxu0 %v827
        %v1066 = vpop.f32.mrb[0].mxu0
        %v1067 = vadd.f32 %v990, %v1066
        %v1068 = vpop.f32.mrb[0].mxu0
        %v1069 = vadd.f32 %v992, %v1068
        %1070 = vdwg.mxu0
        %v1071 = vmax.f32 %v1061, 0.0
        %v1072 = vmax.f32 %v1063, 0.0
        %v1073 = vmax.f32 %v1067, 0.0
        %v1074 = vmax.f32 %v1069, 0.0
        %v1075 = vadd.f32 %v1071, %v442
        %v1076 = vadd.f32 %v1072, %v443
        %v1077 = vadd.f32 %v1073, %v444
        %v1078 = vadd.f32 %v1074, %v445
        %v1079 = vld [vmem:[%s10] sm:$0xff]
        %v1080 = vld [vmem:[%s9] sm:$0xff]
        %v1081 = vld [vmem:[%s9 + $0x8] sm:$0xff]
        %v1082 = vld [vmem:[%s9 + $0x10] sm:$0xff]
        %v1083 = vld [vmem:[%s9 + $0x18] sm:$0xff]
        %v1084 = vld [vmem:[%s9 + $0x20] sm:$0xff]
        %v1085 = vld [vmem:[%s9 + $0x28] sm:$0xff]
        %v1086 = vld [vmem:[%s9 + $0x30] sm:$0xff]
        %v1087 = vld [vmem:[%s9 + $0x38] sm:$0xff]
        %v1088 = vld [vmem:[%s9 + $0x40] sm:$0xff]
        %v1089 = vld [vmem:[%s9 + $0x48] sm:$0xff]
        %v1090 = vld [vmem:[%s9 + $0x50] sm:$0xff]
        %v1091 = vld [vmem:[%s9 + $0x58] sm:$0xff]
        %v1092 = vld [vmem:[%s9 + $0x60] sm:$0xff]
        %v1093 = vld [vmem:[%s9 + $0x68] sm:$0xff]
        %v1094 = vld [vmem:[%s9 + $0x70] sm:$0xff]
        %v1095 = vld [vmem:[%s9 + $0x78] sm:$0xff]
        %v1096 = vld [vmem:[%s9 + $0x80] sm:$0xff]
        %v1097 = vld [vmem:[%s9 + $0x88] sm:$0xff]
        %v1098 = vld [vmem:[%s9 + $0x90] sm:$0xff]
        %v1099 = vld [vmem:[%s9 + $0x98] sm:$0xff]
        %v1100 = vld [vmem:[%s9 + $0xa0] sm:$0xff]
        %v1101 = vld [vmem:[%s9 + $0xa8] sm:$0xff]
        %v1102 = vld [vmem:[%s9 + $0xb0] sm:$0xff]
        %v1103 = vld [vmem:[%s9 + $0xb8] sm:$0xff]
        %v1104 = vld [vmem:[%s9 + $0xc0] sm:$0xff]
        %v1105 = vld [vmem:[%s9 + $0xc8] sm:$0xff]
        %v1106 = vld [vmem:[%s9 + $0xd0] sm:$0xff]
        %v1107 = vld [vmem:[%s9 + $0xd8] sm:$0xff]
        %v1108 = vld [vmem:[%s9 + $0xe0] sm:$0xff]
        %v1109 = vld [vmem:[%s9 + $0xe8] sm:$0xff]
        %v1110 = vld [vmem:[%s9 + $0xf0] sm:$0xff]
        %v1111 = vld [vmem:[%s9 + $0xf8] sm:$0xff]
        %1112 = vmatprep.subr.mxu0 0.0
        %1113 = vmatpush1.msra.mxu0 %v1080
        %1114 = vmatprep.subr.mxu0 0.0
        %1115 = vmatpush1.msra.mxu0 %v1081
        %1116 = vmatprep.subr.mxu0 0.0
        %1117 = vmatpush1.msra.mxu0 %v1082
        %1118 = vmatprep.subr.mxu0 0.0
        %1119 = vmatpush1.msra.mxu0 %v1083
        %1120 = vmatprep.subr.mxu0 0.0
        %1121 = vmatpush1.msra.mxu0 %v1084
        %1122 = vmatprep.subr.mxu0 0.0
        %1123 = vmatpush1.msra.mxu0 %v1085
        %1124 = vmatprep.subr.mxu0 0.0
        %1125 = vmatpush1.msra.mxu0 %v1086
        %1126 = vmatprep.subr.mxu0 0.0
        %1127 = vmatpush1.msra.mxu0 %v1087
        %1128 = vmatprep.subr.mxu0 0.0
        %1129 = vmatpush1.msra.mxu0 %v1088
        %1130 = vmatprep.subr.mxu0 0.0
        %1131 = vmatpush1.msra.mxu0 %v1089
        %1132 = vmatprep.subr.mxu0 0.0
        %1133 = vmatpush1.msra.mxu0 %v1090
        %1134 = vmatprep.subr.mxu0 0.0
        %1135 = vmatpush1.msra.mxu0 %v1091
        %1136 = vmatprep.subr.mxu0 0.0
        %1137 = vmatpush1.msra.mxu0 %v1092
        %1138 = vmatprep.subr.mxu0 0.0
        %1139 = vmatpush1.msra.mxu0 %v1093
        %1140 = vmatprep.subr.mxu0 0.0
        %1141 = vmatpush1.msra.mxu0 %v1094
        %1142 = vmatprep.subr.mxu0 0.0
        %1143 = vmatpush1.msra.mxu0 %v1095
        %1144 = vmatprep.subr.mxu0 0.0
        %1145 = vmatpush1.msra.mxu0 %v1096
        %1146 = vmatprep.subr.mxu0 0.0
        %1147 = vmatpush1.msra.mxu0 %v1097
        %1148 = vmatprep.subr.mxu0 0.0
        %1149 = vmatpush1.msra.mxu0 %v1098
        %1150 = vmatprep.subr.mxu0 0.0
        %1151 = vmatpush1.msra.mxu0 %v1099
        %1152 = vmatprep.subr.mxu0 0.0
        %1153 = vmatpush1.msra.mxu0 %v1100
        %1154 = vmatprep.subr.mxu0 0.0
        %1155 = vmatpush1.msra.mxu0 %v1101
        %1156 = vmatprep.subr.mxu0 0.0
        %1157 = vmatpush1.msra.mxu0 %v1102
        %1158 = vmatprep.subr.mxu0 0.0
        %1159 = vmatpush1.msra.mxu0 %v1103
        %1160 = vmatprep.subr.mxu0 0.0
        %1161 = vmatpush1.msra.mxu0 %v1104
        %1162 = vmatprep.subr.mxu0 0.0
        %1163 = vmatpush1.msra.mxu0 %v1105
        %1164 = vmatprep.subr.mxu0 0.0
        %1165 = vmatpush1.msra.mxu0 %v1106
        %1166 = vmatprep.subr.mxu0 0.0
        %1167 = vmatpush1.msra.mxu0 %v1107
        %1168 = vmatprep.subr.mxu0 0.0
        %1169 = vmatpush1.msra.mxu0 %v1108
        %1170 = vmatprep.subr.mxu0 0.0
        %1171 = vmatpush1.msra.mxu0 %v1109
        %1172 = vmatprep.subr.mxu0 0.0
        %1173 = vmatpush1.msra.mxu0 %v1110
        %1174 = vmatprep.subr.mxu0 0.0
        %1175 = vmatpush1.msra.mxu0 %v1111
        %1176 = vmatprep.mubr.f32.mxu0 %v1076
        %1177 = vmatmul.mubr.f32.gmra.mrb[0].mxu0 %v1075
        %v1178 = vpop.f32.mrb[0].mxu0
        %v1179 = vadd.f32 0.0, %v1178
        %v1180 = vpop.f32.mrb[0].mxu0
        %1181 = vmatprep.mubr.f32.mxu0 %v1078
        %1182 = vmatmul.mubr.f32.gmra.mrb[0].mxu0 %v1077
        %v1183 = vpop.f32.mrb[0].mxu0
        %v1184 = vadd.f32 0.0, %v1183
        %v1185 = vpop.f32.mrb[0].mxu0
        %1186 = vdwg.mxu0
        %vm1187 = vcmask 130048
        %v1189 = vsel %vm1187, %v1079, 0
        %1191 = vmatprep.subr.mxu0 0.0
        %1192 = vmatpush1.msra.mxu0 %v1179
        %1193 = vmatprep.subr.mxu0 0.0
        %1194 = vmatpush1.msra.mxu0 %v1184
        %1195 = vmatprep.subr.mxu0 0.0
        %1196 = vmatpush1.msra.mxu0 0.0
        %1197 = vmatprep.subr.mxu0 0.0
        %1198 = vmatpush1.msra.mxu0 0.0
        %1199 = vmatprep.subr.mxu0 0.0
        %1200 = vmatpush1.msra.mxu0 0.0
        %1201 = vmatprep.subr.mxu0 0.0
        %1202 = vmatpush1.msra.mxu0 0.0
        %1203 = vmatprep.subr.mxu0 0.0
        %1204 = vmatpush1.msra.mxu0 0.0
        %1205 = vmatprep.subr.mxu0 0.0
        %1206 = vmatpush1.msra.mxu0 0.0
        %1207 = vmatprep.subr.mxu0 0.0
        %1208 = vmatpush1.msra.mxu0 0.0
        %1209 = vmatprep.subr.mxu0 0.0
        %1210 = vmatpush1.msra.mxu0 0.0
        %1211 = vmatprep.subr.mxu0 0.0
        %1212 = vmatpush1.msra.mxu0 0.0
        %1213 = vmatprep.subr.mxu0 0.0
        %1214 = vmatpush1.msra.mxu0 0.0
        %1215 = vmatprep.subr.mxu0 0.0
        %1216 = vmatpush1.msra.mxu0 0.0
        %1217 = vmatprep.subr.mxu0 0.0
        %1218 = vmatpush1.msra.mxu0 0.0
        %1219 = vmatprep.subr.mxu0 0.0
        %1220 = vmatpush1.msra.mxu0 0.0
        %1221 = vmatprep.subr.mxu0 0.0
        %1222 = vmatpush1.msra.mxu0 0.0
        %1223 = vmatprep.subr.mxu0 0.0
        %1224 = vmatpush1.msra.mxu0 0.0
        %1225 = vmatprep.subr.mxu0 0.0
        %1226 = vmatpush1.msra.mxu0 0.0
        %1227 = vmatprep.subr.mxu0 0.0
        %1228 = vmatpush1.msra.mxu0 0.0
        %1229 = vmatprep.subr.mxu0 0.0
        %1230 = vmatpush1.msra.mxu0 0.0
        %1231 = vmatprep.subr.mxu0 0.0
        %1232 = vmatpush1.msra.mxu0 0.0
        %1233 = vmatprep.subr.mxu0 0.0
        %1234 = vmatpush1.msra.mxu0 0.0
        %1235 = vmatprep.subr.mxu0 0.0
        %1236 = vmatpush1.msra.mxu0 0.0
        %1237 = vmatprep.subr.mxu0 0.0
        %1238 = vmatpush1.msra.mxu0 0.0
        %1239 = vmatprep.subr.mxu0 0.0
        %1240 = vmatpush1.msra.mxu0 0.0
        %1241 = vmatprep.subr.mxu0 0.0
        %1242 = vmatpush1.msra.mxu0 0.0
        %1243 = vmatprep.subr.mxu0 0.0
        %1244 = vmatpush1.msra.mxu0 0.0
        %1245 = vmatprep.subr.mxu0 0.0
        %1246 = vmatpush1.msra.mxu0 0.0
        %1247 = vmatprep.subr.mxu0 0.0
        %1248 = vmatpush1.msra.mxu0 0.0
        %1249 = vmatprep.subr.mxu0 0.0
        %1250 = vmatpush1.msra.mxu0 0.0
        %1251 = vmatprep.subr.mxu0 0.0
        %1252 = vmatpush1.msra.mxu0 0.0
        %1253 = vmatprep.subr.mxu0 0.0
        %1254 = vmatpush1.msra.mxu0 0.0
        %1255 = vmatprep.mubr.f32.mxu0 0.0
        %1256 = vmatmul.mubr.f32.gmra.mrb[0].mxu0 %v1189
        %v1257 = vpop.f32.mrb[0].mxu0
        %v1258 = vadd.f32 0.0, %v1257
        %v1259 = vpop.f32.mrb[0].mxu0
        %1260 = vdwg.mxu0
        %v1261 = vld [vmem:[#allocation2] sm:$0xff]
        %v1262 = vld [vmem:[#allocation2 + $0x8] sm:$0xff]
        %v1263 = vld [vmem:[#allocation2 + $0x10] sm:$0xff]
        %v1264 = vld [vmem:[#allocation2 + $0x18] sm:$0xff]
        %v1265 = vld [vmem:[#allocation2 + $0x20] sm:$0xff]
        %v1266 = vld [vmem:[#allocation2 + $0x28] sm:$0xff]
        %v1267 = vld [vmem:[#allocation2 + $0x30] sm:$0xff]
        %v1268 = vld [vmem:[#allocation2 + $0x38] sm:$0xff]
        %v1269 = vld [vmem:[#allocation2 + $0x40] sm:$0xff]
        %v1270 = vld [vmem:[#allocation2 + $0x48] sm:$0xff]
        %v1271 = vld [vmem:[#allocation2 + $0x50] sm:$0xff]
        %v1272 = vld [vmem:[#allocation2 + $0x58] sm:$0xff]
        %v1273 = vld [vmem:[#allocation2 + $0x60] sm:$0xff]
        %v1274 = vld [vmem:[#allocation2 + $0x68] sm:$0xff]
        %v1275 = vld [vmem:[#allocation2 + $0x70] sm:$0xff]
        %v1276 = vld [vmem:[#allocation2 + $0x78] sm:$0xff]
        %v1277 = vld [vmem:[%s6] sm:$0x1]
        %v1278 = vld [vmem:[#allocation4] sm:$0xff]
        %v1279 = vld [vmem:[#allocation4 + $0x8] sm:$0xff]
        %v1280 = vld [vmem:[#allocation4 + $0x10] sm:$0xff]
        %v1281 = vld [vmem:[#allocation4 + $0x18] sm:$0xff]
        %v1282 = vld [vmem:[#allocation4 + $0x20] sm:$0xff]
        %v1283 = vld [vmem:[#allocation4 + $0x28] sm:$0xff]
        %v1284 = vld [vmem:[#allocation4 + $0x30] sm:$0xff]
        %v1285 = vld [vmem:[#allocation4 + $0x38] sm:$0xff]
        %v1286 = vld [vmem:[#allocation4 + $0x40] sm:$0xff]
        %v1287 = vld [vmem:[#allocation4 + $0x48] sm:$0xff]
        %v1288 = vld [vmem:[#allocation4 + $0x50] sm:$0xff]
        %v1289 = vld [vmem:[#allocation4 + $0x58] sm:$0xff]
        %v1290 = vld [vmem:[#allocation4 + $0x60] sm:$0xff]
        %v1291 = vld [vmem:[#allocation4 + $0x68] sm:$0xff]
        %v1292 = vld [vmem:[#allocation4 + $0x70] sm:$0xff]
        %v1293 = vld [vmem:[#allocation4 + $0x78] sm:$0xff]
        %v1294 = vld [vmem:[#allocation4 + $0x80] sm:$0xff]
        %v1295 = vld [vmem:[#allocation4 + $0x88] sm:$0xff]
        %v1296 = vld [vmem:[#allocation4 + $0x90] sm:$0xff]
        %v1297 = vld [vmem:[#allocation4 + $0x98] sm:$0xff]
        %v1298 = vld [vmem:[#allocation4 + $0xa0] sm:$0xff]
        %v1299 = vld [vmem:[#allocation4 + $0xa8] sm:$0xff]
        %v1300 = vld [vmem:[#allocation4 + $0xb0] sm:$0xff]
        %v1301 = vld [vmem:[#allocation4 + $0xb8] sm:$0xff]
        %v1302 = vld [vmem:[#allocation4 + $0xc0] sm:$0xff]
        %v1303 = vld [vmem:[#allocation4 + $0xc8] sm:$0xff]
        %v1304 = vld [vmem:[#allocation4 + $0xd0] sm:$0xff]
        %v1305 = vld [vmem:[#allocation4 + $0xd8] sm:$0xff]
        %v1306 = vld [vmem:[#allocation4 + $0xe0] sm:$0xff]
        %v1307 = vld [vmem:[#allocation4 + $0xe8] sm:$0xff]
        %v1308 = vld [vmem:[#allocation4 + $0xf0] sm:$0xff]
        %v1309 = vld [vmem:[#allocation4 + $0xf8] sm:$0xff]
        %v1310 = vld [vmem:[#allocation4 + $0x100] sm:$0xff]
        %v1311 = vld [vmem:[#allocation4 + $0x108] sm:$0xff]
        %v1312 = vld [vmem:[#allocation4 + $0x110] sm:$0xff]
        %v1313 = vld [vmem:[#allocation4 + $0x118] sm:$0xff]
        %v1314 = vld [vmem:[#allocation4 + $0x120] sm:$0xff]
        %v1315 = vld [vmem:[#allocation4 + $0x128] sm:$0xff]
        %v1316 = vld [vmem:[#allocation4 + $0x130] sm:$0xff]
        %v1317 = vld [vmem:[#allocation4 + $0x138] sm:$0xff]
        %v1318 = vld [vmem:[#allocation4 + $0x140] sm:$0xff]
        %v1319 = vld [vmem:[#allocation4 + $0x148] sm:$0xff]
        %v1320 = vld [vmem:[#allocation4 + $0x150] sm:$0xff]
        %v1321 = vld [vmem:[#allocation4 + $0x158] sm:$0xff]
        %v1322 = vld [vmem:[#allocation4 + $0x160] sm:$0xff]
        %v1323 = vld [vmem:[#allocation4 + $0x168] sm:$0xff]
        %v1324 = vld [vmem:[#allocation4 + $0x170] sm:$0xff]
        %v1325 = vld [vmem:[#allocation4 + $0x178] sm:$0xff]
        %v1326 = vld [vmem:[%s8] sm:$0x1]
        %v1328 = vlaneseq
        %v1329 = vshrl.u32 %v1328, 7
        %v1330 = vsub.s32 0, %v1329
        %v1331 = vrot.slane %v1277, %v1330
        %1333 = vmatprep.subr.mxu0 0.0
        %1334 = vmatpush1.msra.mxu0 %v1261
        %1335 = vmatprep.subr.mxu0 0.0
        %1336 = vmatpush1.msra.mxu0 %v1262
        %1337 = vmatprep.subr.mxu0 0.0
        %1338 = vmatpush1.msra.mxu0 %v1263
        %1339 = vmatprep.subr.mxu0 0.0
        %1340 = vmatpush1.msra.mxu0 %v1264
        %1341 = vmatprep.subr.mxu0 0.0
        %1342 = vmatpush1.msra.mxu0 %v1265
        %1343 = vmatprep.subr.mxu0 0.0
        %1344 = vmatpush1.msra.mxu0 %v1266
        %1345 = vmatprep.subr.mxu0 0.0
        %1346 = vmatpush1.msra.mxu0 %v1267
        %1347 = vmatprep.subr.mxu0 0.0
        %1348 = vmatpush1.msra.mxu0 %v1268
        %1349 = vmatprep.subr.mxu0 0.0
        %1350 = vmatpush1.msra.mxu0 %v1269
        %1351 = vmatprep.subr.mxu0 0.0
        %1352 = vmatpush1.msra.mxu0 %v1270
        %1353 = vmatprep.subr.mxu0 0.0
        %1354 = vmatpush1.msra.mxu0 %v1271
        %1355 = vmatprep.subr.mxu0 0.0
        %1356 = vmatpush1.msra.mxu0 %v1272
        %1357 = vmatprep.subr.mxu0 0.0
        %1358 = vmatpush1.msra.mxu0 %v1273
        %1359 = vmatprep.subr.mxu0 0.0
        %1360 = vmatpush1.msra.mxu0 %v1274
        %1361 = vmatprep.subr.mxu0 0.0
        %1362 = vmatpush1.msra.mxu0 %v1275
        %1363 = vmatprep.subr.mxu0 0.0
        %1364 = vmatpush1.msra.mxu0 %v1276
        %1365 = vmatprep.subr.mxu0 0.0
        %1366 = vmatpush1.msra.mxu0 0.0
        %1367 = vmatprep.subr.mxu0 0.0
        %1368 = vmatpush1.msra.mxu0 0.0
        %1369 = vmatprep.subr.mxu0 0.0
        %1370 = vmatpush1.msra.mxu0 0.0
        %1371 = vmatprep.subr.mxu0 0.0
        %1372 = vmatpush1.msra.mxu0 0.0
        %1373 = vmatprep.subr.mxu0 0.0
        %1374 = vmatpush1.msra.mxu0 0.0
        %1375 = vmatprep.subr.mxu0 0.0
        %1376 = vmatpush1.msra.mxu0 0.0
        %1377 = vmatprep.subr.mxu0 0.0
        %1378 = vmatpush1.msra.mxu0 0.0
        %1379 = vmatprep.subr.mxu0 0.0
        %1380 = vmatpush1.msra.mxu0 0.0
        %1381 = vmatprep.subr.mxu0 0.0
        %1382 = vmatpush1.msra.mxu0 0.0
        %1383 = vmatprep.subr.mxu0 0.0
        %1384 = vmatpush1.msra.mxu0 0.0
        %1385 = vmatprep.subr.mxu0 0.0
        %1386 = vmatpush1.msra.mxu0 0.0
        %1387 = vmatprep.subr.mxu0 0.0
        %1388 = vmatpush1.msra.mxu0 0.0
        %1389 = vmatprep.subr.mxu0 0.0
        %1390 = vmatpush1.msra.mxu0 0.0
        %1391 = vmatprep.subr.mxu0 0.0
        %1392 = vmatpush1.msra.mxu0 0.0
        %1393 = vmatprep.subr.mxu0 0.0
        %1394 = vmatpush1.msra.mxu0 0.0
        %1395 = vmatprep.subr.mxu0 0.0
        %1396 = vmatpush1.msra.mxu0 0.0
        %1397 = vmatprep.mubr.f32.mxu0 0.0
        %1398 = vmatmul.mubr.f32.gmra.mrb[0].mxu0 %v1258
        %v1399 = vpop.f32.mrb[0].mxu0
        %v1400 = vadd.f32 %v1331, %v1399
        %v1401 = vpop.f32.mrb[0].mxu0
        %1402 = vdwg.mxu0
        %v1403 = vmax.f32 %v1400, 0.0
        %v1404 = vrot.slane %v1403, 7
        %v1405 = vsel %vm799, 0.0, %v1404
        %vm1406 = vcmp.eq.s32.totalorder %v797, 7
        %v1407 = vrot.slane %v1403, 1
        %v1408 = vsel %vm1406, 0.0, %v1407
        %v1410 = vlaneseq
        %v1411 = vshrl.u32 %v1410, 7
        %v1412 = vsub.s32 0, %v1411
        %v1413 = vrot.slane %v1326, %v1412
        %1415 = vmatprep.subr.mxu0 0.0
        %1416 = vmatpush1.msra.mxu0 %v1278
        %1417 = vmatprep.subr.mxu0 0.0
        %1418 = vmatpush1.msra.mxu0 %v1279
        %1419 = vmatprep.subr.mxu0 0.0
        %1420 = vmatpush1.msra.mxu0 %v1280
        %1421 = vmatprep.subr.mxu0 0.0
        %1422 = vmatpush1.msra.mxu0 %v1281
        %1423 = vmatprep.subr.mxu0 0.0
        %1424 = vmatpush1.msra.mxu0 %v1282
        %1425 = vmatprep.subr.mxu0 0.0
        %1426 = vmatpush1.msra.mxu0 %v1283
        %1427 = vmatprep.subr.mxu0 0.0
        %1428 = vmatpush1.msra.mxu0 %v1284
        %1429 = vmatprep.subr.mxu0 0.0
        %1430 = vmatpush1.msra.mxu0 %v1285
        %1431 = vmatprep.subr.mxu0 0.0
        %1432 = vmatpush1.msra.mxu0 %v1286
        %1433 = vmatprep.subr.mxu0 0.0
        %1434 = vmatpush1.msra.mxu0 %v1287
        %1435 = vmatprep.subr.mxu0 0.0
        %1436 = vmatpush1.msra.mxu0 %v1288
        %1437 = vmatprep.subr.mxu0 0.0
        %1438 = vmatpush1.msra.mxu0 %v1289
        %1439 = vmatprep.subr.mxu0 0.0
        %1440 = vmatpush1.msra.mxu0 %v1290
        %1441 = vmatprep.subr.mxu0 0.0
        %1442 = vmatpush1.msra.mxu0 %v1291
        %1443 = vmatprep.subr.mxu0 0.0
        %1444 = vmatpush1.msra.mxu0 %v1292
        %1445 = vmatprep.subr.mxu0 0.0
        %1446 = vmatpush1.msra.mxu0 %v1293
        %1447 = vmatprep.subr.mxu0 0.0
        %1448 = vmatpush1.msra.mxu0 %v1294
        %1449 = vmatprep.subr.mxu0 0.0
        %1450 = vmatpush1.msra.mxu0 %v1295
        %1451 = vmatprep.subr.mxu0 0.0
        %1452 = vmatpush1.msra.mxu0 %v1296
        %1453 = vmatprep.subr.mxu0 0.0
        %1454 = vmatpush1.msra.mxu0 %v1297
        %1455 = vmatprep.subr.mxu0 0.0
        %1456 = vmatpush1.msra.mxu0 %v1298
        %1457 = vmatprep.subr.mxu0 0.0
        %1458 = vmatpush1.msra.mxu0 %v1299
        %1459 = vmatprep.subr.mxu0 0.0
        %1460 = vmatpush1.msra.mxu0 %v1300
        %1461 = vmatprep.subr.mxu0 0.0
        %1462 = vmatpush1.msra.mxu0 %v1301
        %1463 = vmatprep.subr.mxu0 0.0
        %1464 = vmatpush1.msra.mxu0 %v1302
        %1465 = vmatprep.subr.mxu0 0.0
        %1466 = vmatpush1.msra.mxu0 %v1303
        %1467 = vmatprep.subr.mxu0 0.0
        %1468 = vmatpush1.msra.mxu0 %v1304
        %1469 = vmatprep.subr.mxu0 0.0
        %1470 = vmatpush1.msra.mxu0 %v1305
        %1471 = vmatprep.subr.mxu0 0.0
        %1472 = vmatpush1.msra.mxu0 %v1306
        %1473 = vmatprep.subr.mxu0 0.0
        %1474 = vmatpush1.msra.mxu0 %v1307
        %1475 = vmatprep.subr.mxu0 0.0
        %1476 = vmatpush1.msra.mxu0 %v1308
        %1477 = vmatprep.subr.mxu0 0.0
        %1478 = vmatpush1.msra.mxu0 %v1309
        %1479 = vmatprep.mubr.f32.mxu0 %v1403
        %1480 = vmatmul.mubr.f32.gmra.mrb[0].mxu0 %v1405
        %v1481 = vpop.f32.mrb[0].mxu0
        %v1482 = vadd.f32 %v1413, %v1481
        %v1483 = vpop.f32.mrb[0].mxu0
        %1484 = vdwg.mxu0
        %1485 = vmatprep.subr.mxu0 0.0
        %1486 = vmatpush1.msra.mxu0 %v1310
        %1487 = vmatprep.subr.mxu0 0.0
        %1488 = vmatpush1.msra.mxu0 %v1311
        %1489 = vmatprep.subr.mxu0 0.0
        %1490 = vmatpush1.msra.mxu0 %v1312
        %1491 = vmatprep.subr.mxu0 0.0
        %1492 = vmatpush1.msra.mxu0 %v1313
        %1493 = vmatprep.subr.mxu0 0.0
        %1494 = vmatpush1.msra.mxu0 %v1314
        %1495 = vmatprep.subr.mxu0 0.0
        %1496 = vmatpush1.msra.mxu0 %v1315
        %1497 = vmatprep.subr.mxu0 0.0
        %1498 = vmatpush1.msra.mxu0 %v1316
        %1499 = vmatprep.subr.mxu0 0.0
        %1500 = vmatpush1.msra.mxu0 %v1317
        %1501 = vmatprep.subr.mxu0 0.0
        %1502 = vmatpush1.msra.mxu0 %v1318
        %1503 = vmatprep.subr.mxu0 0.0
        %1504 = vmatpush1.msra.mxu0 %v1319
        %1505 = vmatprep.subr.mxu0 0.0
        %1506 = vmatpush1.msra.mxu0 %v1320
        %1507 = vmatprep.subr.mxu0 0.0
        %1508 = vmatpush1.msra.mxu0 %v1321
        %1509 = vmatprep.subr.mxu0 0.0
        %1510 = vmatpush1.msra.mxu0 %v1322
        %1511 = vmatprep.subr.mxu0 0.0
        %1512 = vmatpush1.msra.mxu0 %v1323
        %1513 = vmatprep.subr.mxu0 0.0
        %1514 = vmatpush1.msra.mxu0 %v1324
        %1515 = vmatprep.subr.mxu0 0.0
        %1516 = vmatpush1.msra.mxu0 %v1325
        %1517 = vmatprep.subr.mxu0 0.0
        %1518 = vmatpush1.msra.mxu0 0.0
        %1519 = vmatprep.subr.mxu0 0.0
        %1520 = vmatpush1.msra.mxu0 0.0
        %1521 = vmatprep.subr.mxu0 0.0
        %1522 = vmatpush1.msra.mxu0 0.0
        %1523 = vmatprep.subr.mxu0 0.0
        %1524 = vmatpush1.msra.mxu0 0.0
        %1525 = vmatprep.subr.mxu0 0.0
        %1526 = vmatpush1.msra.mxu0 0.0
        %1527 = vmatprep.subr.mxu0 0.0
        %1528 = vmatpush1.msra.mxu0 0.0
        %1529 = vmatprep.subr.mxu0 0.0
        %1530 = vmatpush1.msra.mxu0 0.0
        %1531 = vmatprep.subr.mxu0 0.0
        %1532 = vmatpush1.msra.mxu0 0.0
        %1533 = vmatprep.subr.mxu0 0.0
        %1534 = vmatpush1.msra.mxu0 0.0
        %1535 = vmatprep.subr.mxu0 0.0
        %1536 = vmatpush1.msra.mxu0 0.0
        %1537 = vmatprep.subr.mxu0 0.0
        %1538 = vmatpush1.msra.mxu0 0.0
        %1539 = vmatprep.subr.mxu0 0.0
        %1540 = vmatpush1.msra.mxu0 0.0
        %1541 = vmatprep.subr.mxu0 0.0
        %1542 = vmatpush1.msra.mxu0 0.0
        %1543 = vmatprep.subr.mxu0 0.0
        %1544 = vmatpush1.msra.mxu0 0.0
        %1545 = vmatprep.subr.mxu0 0.0
        %1546 = vmatpush1.msra.mxu0 0.0
        %1547 = vmatprep.subr.mxu0 0.0
        %1548 = vmatpush1.msra.mxu0 0.0
        %1549 = vmatprep.mubr.f32.mxu0 0.0
        %1550 = vmatmul.mubr.f32.gmra.mrb[0].mxu0 %v1408
        %v1551 = vpop.f32.mrb[0].mxu0
        %v1552 = vadd.f32 %v1482, %v1551
        %v1553 = vpop.f32.mrb[0].mxu0
        %1554 = vdwg.mxu0
        %v1555 = vmax.f32 %v1552, 0.0
        %v1556 = vadd.f32 %v1555, %v1258
        %v1557 = vld [vmem:[%s11] sm:$0xf]
        %vm1558 = vcmask 64512
        %v1560 = vsel %vm1558, %v1557, 0
        %1562 = vmatprep.subr.mxu0 0.0
        %1563 = vmatpush1.msra.mxu0 %v1556
        %1564 = vmatprep.subr.mxu0 0.0
        %1565 = vmatpush1.msra.mxu0 0.0
        %1566 = vmatprep.subr.mxu0 0.0
        %1567 = vmatpush1.msra.mxu0 0.0
        %1568 = vmatprep.subr.mxu0 0.0
        %1569 = vmatpush1.msra.mxu0 0.0
        %1570 = vmatprep.subr.mxu0 0.0
        %1571 = vmatpush1.msra.mxu0 0.0
        %1572 = vmatprep.subr.mxu0 0.0
        %1573 = vmatpush1.msra.mxu0 0.0
        %1574 = vmatprep.subr.mxu0 0.0
        %1575 = vmatpush1.msra.mxu0 0.0
        %1576 = vmatprep.subr.mxu0 0.0
        %1577 = vmatpush1.msra.mxu0 0.0
        %1578 = vmatprep.subr.mxu0 0.0
        %1579 = vmatpush1.msra.mxu0 0.0
        %1580 = vmatprep.subr.mxu0 0.0
        %1581 = vmatpush1.msra.mxu0 0.0
        %1582 = vmatprep.subr.mxu0 0.0
        %1583 = vmatpush1.msra.mxu0 0.0
        %1584 = vmatprep.subr.mxu0 0.0
        %1585 = vmatpush1.msra.mxu0 0.0
        %1586 = vmatprep.subr.mxu0 0.0
        %1587 = vmatpush1.msra.mxu0 0.0
        %1588 = vmatprep.subr.mxu0 0.0
        %1589 = vmatpush1.msra.mxu0 0.0
        %1590 = vmatprep.subr.mxu0 0.0
        %1591 = vmatpush1.msra.mxu0 0.0
        %1592 = vmatprep.subr.mxu0 0.0
        %1593 = vmatpush1.msra.mxu0 0.0
        %1594 = vmatprep.subr.mxu0 0.0
        %1595 = vmatpush1.msra.mxu0 0.0
        %1596 = vmatprep.subr.mxu0 0.0
        %1597 = vmatpush1.msra.mxu0 0.0
        %1598 = vmatprep.subr.mxu0 0.0
        %1599 = vmatpush1.msra.mxu0 0.0
        %1600 = vmatprep.subr.mxu0 0.0
        %1601 = vmatpush1.msra.mxu0 0.0
        %1602 = vmatprep.subr.mxu0 0.0
        %1603 = vmatpush1.msra.mxu0 0.0
        %1604 = vmatprep.subr.mxu0 0.0
        %1605 = vmatpush1.msra.mxu0 0.0
        %1606 = vmatprep.subr.mxu0 0.0
        %1607 = vmatpush1.msra.mxu0 0.0
        %1608 = vmatprep.subr.mxu0 0.0
        %1609 = vmatpush1.msra.mxu0 0.0
        %1610 = vmatprep.subr.mxu0 0.0
        %1611 = vmatpush1.msra.mxu0 0.0
        %1612 = vmatprep.subr.mxu0 0.0
        %1613 = vmatpush1.msra.mxu0 0.0
        %1614 = vmatprep.subr.mxu0 0.0
        %1615 = vmatpush1.msra.mxu0 0.0
        %1616 = vmatprep.subr.mxu0 0.0
        %1617 = vmatpush1.msra.mxu0 0.0
        %1618 = vmatprep.subr.mxu0 0.0
        %1619 = vmatpush1.msra.mxu0 0.0
        %1620 = vmatprep.subr.mxu0 0.0
        %1621 = vmatpush1.msra.mxu0 0.0
        %1622 = vmatprep.subr.mxu0 0.0
        %1623 = vmatpush1.msra.mxu0 0.0
        %1624 = vmatprep.subr.mxu0 0.0
        %1625 = vmatpush1.msra.mxu0 0.0
        %1626 = vmatprep.mubr.f32.mxu0 0.0
        %1627 = vmatmul.mubr.f32.gmra.mrb[0].mxu0 %v1560
        %v1628 = vpop.f32.mrb[0].mxu0
        %v1629 = vadd.f32 0.0, %v1628
        %v1630 = vpop.f32.mrb[0].mxu0
        %1631 = vdwg.mxu0
        %v1632 = vmax.f32 %v1629, 0.0
        %1633 = vst [vmem:[%s441] sm:$0xf] %v1632
        %p1634 = scmp.lt.s32.totalorder %s25, 3
        %s1635 = scalar_select %p1634, %s25, 3
        %s1636 = smul.addr %s1635, 4
        %s1637 = scalar_lea.vmem %s12, %s1636
        // Predicated region
        $region77: #{seq_net_forward.1} parent=67 // pred_check
          %p1638 = pneg %p300
        $region78: #{seq_net_forward.1} parent=67 // pred_check_branch
          %1640 = sbr.rel (%p1638) target = $region80
        $region79: #{seq_net_forward.1} parent=67 // pred_region
          _
        $region80: #{seq_net_forward.1} parent=67 // pred_fallthru
          _
      $region68: #{seq_net_forward.1} parent=5 // pred_fallthru
        _
      %p1641 = scmp.le.s32.totalorder 2, %s20
      // Predicated region
      $region81: #{seq_net_forward.1} parent=5 // pred_check
        %p1642 = pneg %p1641
      $region82: #{seq_net_forward.1} parent=5 // pred_check_branch
        %1644 = sbr.rel (%p1642) target = $region84
      $region83: #{seq_net_forward.1} parent=5 // pred_region
        %s1645 = ssub.s32 %s20, 2
        // Predicated region
        $region85: #{seq_net_forward.1} parent=83 // pred_check
          %p1646 = pneg %p306
        $region86: #{seq_net_forward.1} parent=83 // pred_check_branch
          %1648 = sbr.rel (%p1646) target = $region88
        $region87: #{seq_net_forward.1} parent=83 // pred_region
          %p1649 = scmp.lt.s32.totalorder %s26, 3
          %s1650 = scalar_select %p1649, %s26, 3
          %s1651 = smul.addr %s1650, 4
          %s1652 = scalar_lea.vmem %s12, %s1651
        $region88: #{seq_net_forward.1} parent=83 // pred_fallthru
          _
      $region84: #{seq_net_forward.1} parent=5 // pred_fallthru
        _
    $region6: #{seq_net_forward.1} parent=1 // loop_footer
      %s24 = sadd.s32 1, %s20
    $region7: #{seq_net_forward.1} parent=1 // loop_footer_branch
      %19 = sbr.rel target = $region3
    $region8: #{seq_net_forward.1} parent=1 // loop_exit
      _
    %1653 = vsyncpa [#allocation3], 1
    %s1654 = scalar_lea.sflag [#allocation3], 1
    %1655 = vsyncpa %s1654, 1
    %1656 = vsyncpa [#allocation5], 1

</llo_original>
